<compile_context>
chip_gen: v5e
topology: v5e:2x2
jax: 0.10.0
libtpu: 0.0.40
codegen_flags: <defaults>
</compile_context>

<pallas_src>
import jax
import jax.numpy as jnp
from jax import lax
from jax.experimental import pallas as pl
from jax.experimental.pallas import tpu as pltpu

BN_EPS = 1e-5


def convbn_kernel(xp_ref, w_ref, gamma_ref, beta_ref, o_ref):
    # xp_ref:    [N, H+2, W+2, Cin]  zero-padded NHWC input, bf16 (VMEM)
    # w_ref:     [Cout, 9*Cin]       conv weights, columns ordered (dy, dx, cin), bf16
    # gamma_ref: [Cout, 1]           BN weight, f32
    # beta_ref:  [Cout, 1]           BN bias, f32
    # o_ref:     [Cout, N*H*W]       output, f32, lane-dense (N*H*W lanes)
    N, Hp, Wp, Cin = xp_ref.shape
    H, W = Hp - 2, Wp - 2
    npix = N * H * W

    xp = xp_ref[...]  # load padded input once (bf16)

    # im2col: 9 shifted 3x3-tap windows concatenated along the channel (lane)
    # axis, pixels flattened into the sublane axis -> (npix, 9*Cin).
    taps = [xp[:, dy:dy + H, dx:dx + W, :] for dy in range(3) for dx in range(3)]
    patches = jnp.concatenate(taps, axis=-1).reshape(npix, 9 * Cin)

    # Single MXU matmul ("NT" contraction, same dimension numbers as q @ k^T in
    # flash attention): (Cout, 9*Cin) x (npix, 9*Cin) -> (Cout, npix), f32 acc.
    acc = lax.dot_general(
        w_ref[...], patches,
        dimension_numbers=(((1,), (1,)), ((), ())),
        preferred_element_type=jnp.float32)                 # [Cout, npix] f32

    # BatchNorm2d training-mode semantics: per-channel batch mean and *biased*
    # variance over N*H*W, computed in one pass (sum & sum of squares).
    inv_n = 1.0 / float(npix)
    s = jnp.sum(acc, axis=1, keepdims=True)                 # [Cout, 1]
    ss = jnp.sum(acc * acc, axis=1, keepdims=True)          # [Cout, 1]
    mean = s * inv_n
    var = ss * inv_n - mean * mean
    inv_std = lax.rsqrt(var + BN_EPS)
    scale = gamma_ref[...] * inv_std                        # [Cout, 1]
    shift = beta_ref[...] - mean * scale                    # [Cout, 1]

    # Fused BN affine + ReLU; dense (unmasked) store, minor dim = npix.
    o_ref[...] = jnp.maximum(acc * scale + shift, 0.0).astype(o_ref.dtype)


def conv_bn_relu(x_nchw, w_oihw, gamma, beta):
    """x_nchw: [N, C_in, H, W]; w_oihw: [C_out, C_in, 3, 3]; returns NCHW f32."""
    N, Cin, H, W = x_nchw.shape
    Cout = w_oihw.shape[0]
    npix = N * H * W

    # Glue (single fused XLA producer): NCHW -> NHWC, bf16 cast, zero pad(1).
    # TODO(synk): at large sizes the pad could be fused into the kernel
    # (VMEM scratch) to save one HBM round trip of the input.
    x_nhwc = jnp.transpose(x_nchw, (0, 2, 3, 1)).astype(jnp.bfloat16)
    xp = jnp.pad(x_nhwc, ((0, 0), (1, 1), (1, 1), (0, 0)))

    # [Cout, Cin, 3, 3] -> [Cout, 3, 3, Cin] -> [Cout, 9*Cin]  (columns = (dy,dx,ci))
    w_mat = jnp.transpose(w_oihw, (0, 2, 3, 1)).reshape(Cout, 9 * Cin)
    w_mat = w_mat.astype(jnp.bfloat16)
    gamma2 = gamma.reshape(Cout, 1).astype(jnp.float32)
    beta2 = beta.reshape(Cout, 1).astype(jnp.float32)

    cost = pl.CostEstimate(
        flops=2 * npix * 9 * Cin * Cout + 8 * npix * Cout,
        transcendentals=Cout,
        bytes_accessed=int(xp.size) * 2 + int(w_mat.size) * 2
        + npix * Cout * 4 + 2 * Cout * 4,
    )

    out2d = pl.pallas_call(
        convbn_kernel,
        out_shape=jax.ShapeDtypeStruct((Cout, npix), jnp.float32),
        in_specs=[pl.BlockSpec(memory_space=pltpu.MemorySpace.VMEM)] * 4,
        out_specs=pl.BlockSpec(memory_space=pltpu.MemorySpace.VMEM),
        cost_estimate=cost,
        compiler_params=pltpu.CompilerParams(vmem_limit_bytes=32 * 1024 * 1024),
    )(xp, w_mat, gamma2, beta2)

    # (Cout, N*H*W) -> (Cout, N, H, W) -> NCHW (leading-dim transpose only).
    return jnp.transpose(out2d.reshape(Cout, N, H, W), (1, 0, 2, 3))


def reference_conv_bn_relu(x_nchw, w_oihw, gamma, beta):
    """Pure-JAX reference (NCHW in/out). Inputs bf16-rounded to match the
    kernel's MXU input precision; all math in f32."""
    x = x_nchw.astype(jnp.bfloat16).astype(jnp.float32)
    w = w_oihw.astype(jnp.bfloat16).astype(jnp.float32)
    x_nhwc = jnp.transpose(x, (0, 2, 3, 1))
    w_hwio = jnp.transpose(w, (2, 3, 1, 0))
    conv = lax.conv_general_dilated(
        x_nhwc, w_hwio, window_strides=(1, 1), padding="SAME",
        dimension_numbers=("NHWC", "HWIO", "NHWC"),
        precision=lax.Precision.HIGHEST)
    mean = jnp.mean(conv, axis=(0, 1, 2), keepdims=True)
    var = jnp.mean((conv - mean) ** 2, axis=(0, 1, 2), keepdims=True)
    y = (conv - mean) * lax.rsqrt(var + BN_EPS) * gamma + beta
    y = jnp.maximum(y, 0.0)
    return jnp.transpose(y, (0, 3, 1, 2))


if __name__ == "__main__":
    # ConvBN(do_batchnorm=True, c_in=4, c_out=8, bn_weight_init=1.0, pool=None)
    N, C_IN, C_OUT, H, W = 2, 4, 8, 16, 16

    key = jax.random.PRNGKey(0)
    kx, kw = jax.random.split(key)
    x = jax.random.normal(kx, (N, C_IN, H, W), dtype=jnp.float32)
    w = jax.random.normal(kw, (C_OUT, C_IN, 3, 3), dtype=jnp.float32) * 0.1
    gamma = jnp.full((C_OUT,), 1.0, dtype=jnp.float32)   # bn_weight_init=1.0
    beta = jnp.zeros((C_OUT,), dtype=jnp.float32)        # default BN bias

    out = jax.block_until_ready(conv_bn_relu(x, w, gamma, beta))

    ref = reference_conv_bn_relu(x, w, gamma, beta)
    assert out.shape == (N, C_OUT, H, W), out.shape
    assert jnp.allclose(out, ref, atol=2e-3, rtol=2e-3), "mismatch vs reference"

    # TODO(synk): BatchNorm running_mean/running_var buffer updates are a
    # training-time side effect and are not reproduced (they do not affect the
    # forward output).
    print("KERNEL_OK")
</pallas_src>

<mosaic_0001>
module attributes {stable_mosaic.version = 11 : i64} {
  func.func @convbn_kernel(%arg0: memref<2x18x18x4xbf16, #tpu.memory_space<vmem>>, %arg1: memref<8x36xbf16, #tpu.memory_space<vmem>>, %arg2: memref<8x1xf32, #tpu.memory_space<vmem>>, %arg3: memref<8x1xf32, #tpu.memory_space<vmem>>, %arg4: memref<8x512xf32, #tpu.memory_space<vmem>>) attributes {dimension_semantics = [], scalar_prefetch = 0 : i64, scratch_operands = 0 : i64, tpu.core_type = #tpu.core_type<tc>} {
    %c0 = arith.constant 0 : index
    %c0_0 = arith.constant 0 : index
    %c0_1 = arith.constant 0 : index
    %c0_2 = arith.constant 0 : index
    %0 = vector.load %arg0[%c0, %c0_0, %c0_1, %c0_2] : memref<2x18x18x4xbf16, #tpu.memory_space<vmem>>, vector<2x18x18x4xbf16>
    %1 = vector.extract_strided_slice %0 {offsets = [0, 0, 0, 0], sizes = [2, 16, 16, 4], strides = [1, 1, 1, 1]} : vector<2x18x18x4xbf16> to vector<2x16x16x4xbf16>
    %2 = vector.extract_strided_slice %0 {offsets = [0, 0, 1, 0], sizes = [2, 16, 16, 4], strides = [1, 1, 1, 1]} : vector<2x18x18x4xbf16> to vector<2x16x16x4xbf16>
    %3 = vector.extract_strided_slice %0 {offsets = [0, 0, 2, 0], sizes = [2, 16, 16, 4], strides = [1, 1, 1, 1]} : vector<2x18x18x4xbf16> to vector<2x16x16x4xbf16>
    %4 = vector.extract_strided_slice %0 {offsets = [0, 1, 0, 0], sizes = [2, 16, 16, 4], strides = [1, 1, 1, 1]} : vector<2x18x18x4xbf16> to vector<2x16x16x4xbf16>
    %5 = vector.extract_strided_slice %0 {offsets = [0, 1, 1, 0], sizes = [2, 16, 16, 4], strides = [1, 1, 1, 1]} : vector<2x18x18x4xbf16> to vector<2x16x16x4xbf16>
    %6 = vector.extract_strided_slice %0 {offsets = [0, 1, 2, 0], sizes = [2, 16, 16, 4], strides = [1, 1, 1, 1]} : vector<2x18x18x4xbf16> to vector<2x16x16x4xbf16>
    %7 = vector.extract_strided_slice %0 {offsets = [0, 2, 0, 0], sizes = [2, 16, 16, 4], strides = [1, 1, 1, 1]} : vector<2x18x18x4xbf16> to vector<2x16x16x4xbf16>
    %8 = vector.extract_strided_slice %0 {offsets = [0, 2, 1, 0], sizes = [2, 16, 16, 4], strides = [1, 1, 1, 1]} : vector<2x18x18x4xbf16> to vector<2x16x16x4xbf16>
    %9 = vector.extract_strided_slice %0 {offsets = [0, 2, 2, 0], sizes = [2, 16, 16, 4], strides = [1, 1, 1, 1]} : vector<2x18x18x4xbf16> to vector<2x16x16x4xbf16>
    %10 = tpu.concatenate %1, %2, %3, %4, %5, %6, %7, %8, %9 in 3 : vector<2x16x16x4xbf16>, vector<2x16x16x4xbf16>, vector<2x16x16x4xbf16>, vector<2x16x16x4xbf16>, vector<2x16x16x4xbf16>, vector<2x16x16x4xbf16>, vector<2x16x16x4xbf16>, vector<2x16x16x4xbf16>, vector<2x16x16x4xbf16> -> vector<2x16x16x36xbf16>
    %11 = vector.shape_cast %10 : vector<2x16x16x36xbf16> to vector<512x36xbf16>
    %c0_3 = arith.constant 0 : index
    %c0_4 = arith.constant 0 : index
    %12 = vector.load %arg1[%c0_3, %c0_4] : memref<8x36xbf16, #tpu.memory_space<vmem>>, vector<8x36xbf16>
    %cst = arith.constant dense<0.000000e+00> : vector<8x512xf32>
    %13 = tpu.matmul %12, %11, %cst {dimension_numbers = #tpu.dot_dimension_numbers<[1], [1], [0], [0], [0, 0, 1, 0], [], []>} : vector<8x36xbf16>, vector<512x36xbf16>, vector<8x512xf32> -> vector<8x512xf32>
    %cst_5 = arith.constant dense<0.000000e+00> : vector<8xf32>
    %14 = vector.multi_reduction <add>, %13, %cst_5 [1] : vector<8x512xf32> to vector<8xf32>
    %15 = vector.shape_cast %14 : vector<8xf32> to vector<8x1xf32>
    %16 = arith.mulf %13, %13 : vector<8x512xf32>
    %cst_6 = arith.constant dense<0.000000e+00> : vector<8xf32>
    %17 = vector.multi_reduction <add>, %16, %cst_6 [1] : vector<8x512xf32> to vector<8xf32>
    %18 = vector.shape_cast %17 : vector<8xf32> to vector<8x1xf32>
    %cst_7 = arith.constant 0.001953125 : f32
    %19 = vector.broadcast %cst_7 : f32 to vector<8x1xf32>
    %20 = arith.mulf %15, %19 : vector<8x1xf32>
    %cst_8 = arith.constant 0.001953125 : f32
    %21 = vector.broadcast %cst_8 : f32 to vector<8x1xf32>
    %22 = arith.mulf %18, %21 : vector<8x1xf32>
    %23 = arith.mulf %20, %20 : vector<8x1xf32>
    %24 = arith.subf %22, %23 : vector<8x1xf32>
    %cst_9 = arith.constant 9.99999974E-6 : f32
    %25 = vector.broadcast %cst_9 : f32 to vector<8x1xf32>
    %26 = arith.addf %24, %25 : vector<8x1xf32>
    %27 = math.rsqrt %26 : vector<8x1xf32>
    %c0_10 = arith.constant 0 : index
    %c0_11 = arith.constant 0 : index
    %28 = vector.load %arg2[%c0_10, %c0_11] : memref<8x1xf32, #tpu.memory_space<vmem>>, vector<8x1xf32>
    %29 = arith.mulf %28, %27 : vector<8x1xf32>
    %c0_12 = arith.constant 0 : index
    %c0_13 = arith.constant 0 : index
    %30 = vector.load %arg3[%c0_12, %c0_13] : memref<8x1xf32, #tpu.memory_space<vmem>>, vector<8x1xf32>
    %31 = arith.mulf %20, %29 : vector<8x1xf32>
    %32 = arith.subf %30, %31 : vector<8x1xf32>
    %33 = vector.broadcast %29 : vector<8x1xf32> to vector<8x512xf32>
    %34 = arith.mulf %13, %33 : vector<8x512xf32>
    %35 = vector.broadcast %32 : vector<8x1xf32> to vector<8x512xf32>
    %36 = arith.addf %34, %35 : vector<8x512xf32>
    %cst_14 = arith.constant 0.000000e+00 : f32
    %37 = vector.broadcast %cst_14 : f32 to vector<8x512xf32>
    %38 = arith.maximumf %36, %37 : vector<8x512xf32>
    %c0_15 = arith.constant 0 : index
    %c0_16 = arith.constant 0 : index
    %39 = vector.load %arg4[%c0_15, %c0_16] : memref<8x512xf32, #tpu.memory_space<vmem>>, vector<8x512xf32>
    tpu.vector_store %arg4[%c0_15, %c0_16], %38 {strides = array<i32>} : memref<8x512xf32, #tpu.memory_space<vmem>>, vector<8x512xf32>,
    return
  }
}

</mosaic_0001>

<llo_original>
// kernel: tpu_custom_call.1
$region0: #{tpu_custom_call.1}
  #allocation0 [shape = 'u32[]', space=smem, size = 0x4, offset = 0x4, fixed_abs, tag = 'smem constant byte address 0x4 - core index']
  #allocation1 [shape = 'u32[72,128]{1,0:T(1,128)}', space=vmem, size = 0x9000, scoped, tag = 'internal scratch']
  %s0 = inlined_call_operand.vmem [shape: bf16[2,18,18,4], index: 0, kind: input, shape index: {}]
  %s1 = inlined_call_operand.vmem [shape: bf16[8,36], index: 1, kind: input, shape index: {}]
  %s2 = inlined_call_operand.vmem [shape: f32[8,1], index: 2, kind: input, shape index: {}]
  %s3 = inlined_call_operand.vmem [shape: f32[8,1], index: 3, kind: input, shape index: {}]
  %s4 = inlined_call_operand.hbm [shape: f32[8,512], index: 4, kind: output, shape index: {}]
  %s5 = sld [smem:[#allocation0]]
  $region26: #{tpu_custom_call.1} parent=0
    _
  %s7 = ssub.s32 1, %s5
  %s8 = scalar_select 0, %s7, %s5
  $region1: #{tpu_custom_call.1} parent=0
    #allocation2 [shape = 'u8[16384]{0}', space=vmem, size = 0x4000, scoped, tag = 'output window, operand 0, single buffered']
    #allocation3 [shape = 's32[1]{0}', space=sflag, size = 0x4, scoped, tag = 'scoped memory for tpu_custom_call.1']
    %9 = vsyncpa [#allocation3], 0
    // Predicated region
    $region2: #{tpu_custom_call.1} parent=1 // pred_check
      _
    $region3: #{tpu_custom_call.1} parent=1 // pred_check_branch
      %11 = sbr.rel (0) target = $region5
    $region4: #{tpu_custom_call.1} parent=1 // pred_region
      _
    $region5: #{tpu_custom_call.1} parent=1 // pred_fallthru
      _
    // Predicated region
    $region6: #{tpu_custom_call.1} parent=1 // pred_check
      _
    $region7: #{tpu_custom_call.1} parent=1 // pred_check_branch
      %13 = sbr.rel (0) target = $region9
    $region8: #{tpu_custom_call.1} parent=1 // pred_region
      _
    $region9: #{tpu_custom_call.1} parent=1 // pred_fallthru
      _
    // Predicated region
    $region10: #{tpu_custom_call.1} parent=1 // pred_check
      _
    $region11: #{tpu_custom_call.1} parent=1 // pred_check_branch
      %15 = sbr.rel (0) target = $region13
    $region12: #{tpu_custom_call.1} parent=1 // pred_region
      _
    $region13: #{tpu_custom_call.1} parent=1 // pred_fallthru
      _
    // Predicated region
    $region14: #{tpu_custom_call.1} parent=1 // pred_check
      _
    $region15: #{tpu_custom_call.1} parent=1 // pred_check_branch
      %17 = sbr.rel (0) target = $region17
    $region16: #{tpu_custom_call.1} parent=1 // pred_region
      _
    $region17: #{tpu_custom_call.1} parent=1 // pred_fallthru
      _
    %v18 = vld [vmem:[%s0] sm:$0xf]
    %v19 = vld [vmem:[%s0 + $0x4] sm:$0xf]
    %v20 = vld [vmem:[%s0 + $0x8] sm:$0x1]
    %v21 = vld [vmem:[%s0 + $0xc] sm:$0xf]
    %v22 = vld [vmem:[%s0 + $0x10] sm:$0xf]
    %v23 = vld [vmem:[%s0 + $0x14] sm:$0x1]
    %v24 = vld [vmem:[%s0 + $0x18] sm:$0xf]
    %v25 = vld [vmem:[%s0 + $0x1c] sm:$0xf]
    %v26 = vld [vmem:[%s0 + $0x20] sm:$0x1]
    %v27 = vld [vmem:[%s0 + $0x24] sm:$0xf]
    %v28 = vld [vmem:[%s0 + $0x28] sm:$0xf]
    %v29 = vld [vmem:[%s0 + $0x2c] sm:$0x1]
    %v30 = vld [vmem:[%s0 + $0x30] sm:$0xf]
    %v31 = vld [vmem:[%s0 + $0x34] sm:$0xf]
    %v32 = vld [vmem:[%s0 + $0x38] sm:$0x1]
    %v33 = vld [vmem:[%s0 + $0x3c] sm:$0xf]
    %v34 = vld [vmem:[%s0 + $0x40] sm:$0xf]
    %v35 = vld [vmem:[%s0 + $0x44] sm:$0x1]
    %v36 = vld [vmem:[%s0 + $0x48] sm:$0xf]
    %v37 = vld [vmem:[%s0 + $0x4c] sm:$0xf]
    %v38 = vld [vmem:[%s0 + $0x50] sm:$0x1]
    %v39 = vld [vmem:[%s0 + $0x54] sm:$0xf]
    %v40 = vld [vmem:[%s0 + $0x58] sm:$0xf]
    %v41 = vld [vmem:[%s0 + $0x5c] sm:$0x1]
    %v42 = vld [vmem:[%s0 + $0x60] sm:$0xf]
    %v43 = vld [vmem:[%s0 + $0x64] sm:$0xf]
    %v44 = vld [vmem:[%s0 + $0x68] sm:$0x1]
    %v45 = vld [vmem:[%s0 + $0x6c] sm:$0xf]
    %v46 = vld [vmem:[%s0 + $0x70] sm:$0xf]
    %v47 = vld [vmem:[%s0 + $0x74] sm:$0x1]
    %v48 = vld [vmem:[%s0 + $0x78] sm:$0xf]
    %v49 = vld [vmem:[%s0 + $0x7c] sm:$0xf]
    %v50 = vld [vmem:[%s0 + $0x80] sm:$0x1]
    %v51 = vld [vmem:[%s0 + $0x84] sm:$0xf]
    %v52 = vld [vmem:[%s0 + $0x88] sm:$0xf]
    %v53 = vld [vmem:[%s0 + $0x8c] sm:$0x1]
    %v54 = vld [vmem:[%s0 + $0x90] sm:$0xf]
    %v55 = vld [vmem:[%s0 + $0x94] sm:$0xf]
    %v56 = vld [vmem:[%s0 + $0x98] sm:$0x1]
    %v57 = vld [vmem:[%s0 + $0x9c] sm:$0xf]
    %v58 = vld [vmem:[%s0 + $0xa0] sm:$0xf]
    %v59 = vld [vmem:[%s0 + $0xa4] sm:$0x1]
    %v60 = vld [vmem:[%s0 + $0xa8] sm:$0xf]
    %v61 = vld [vmem:[%s0 + $0xac] sm:$0xf]
    %v62 = vld [vmem:[%s0 + $0xb0] sm:$0x1]
    %v63 = vld [vmem:[%s0 + $0xb4] sm:$0xf]
    %v64 = vld [vmem:[%s0 + $0xb8] sm:$0xf]
    %v65 = vld [vmem:[%s0 + $0xbc] sm:$0x1]
    %v66 = vld [vmem:[%s0 + $0xc0] sm:$0xf]
    %v67 = vld [vmem:[%s0 + $0xc4] sm:$0xf]
    %v68 = vld [vmem:[%s0 + $0xc8] sm:$0x1]
    %v69 = vld [vmem:[%s0 + $0xcc] sm:$0xf]
    %v70 = vld [vmem:[%s0 + $0xd0] sm:$0xf]
    %v71 = vld [vmem:[%s0 + $0xd4] sm:$0x1]
    %v72 = vld [vmem:[%s0 + $0xd8] sm:$0xf]
    %v73 = vld [vmem:[%s0 + $0xdc] sm:$0xf]
    %v74 = vld [vmem:[%s0 + $0xe0] sm:$0x1]
    %v75 = vld [vmem:[%s0 + $0xe4] sm:$0xf]
    %v76 = vld [vmem:[%s0 + $0xe8] sm:$0xf]
    %v77 = vld [vmem:[%s0 + $0xec] sm:$0x1]
    %v78 = vld [vmem:[%s0 + $0xf0] sm:$0xf]
    %v79 = vld [vmem:[%s0 + $0xf4] sm:$0xf]
    %v80 = vld [vmem:[%s0 + $0xf8] sm:$0x1]
    %v81 = vld [vmem:[%s0 + $0xfc] sm:$0xf]
    %v82 = vld [vmem:[%s0 + $0x100] sm:$0xf]
    %v83 = vld [vmem:[%s0 + $0x104] sm:$0x1]
    %v84 = vld [vmem:[%s0 + $0x108] sm:$0xf]
    %v85 = vld [vmem:[%s0 + $0x10c] sm:$0xf]
    %v86 = vld [vmem:[%s0 + $0x110] sm:$0x1]
    %v87 = vld [vmem:[%s0 + $0x114] sm:$0xf]
    %v88 = vld [vmem:[%s0 + $0x118] sm:$0xf]
    %v89 = vld [vmem:[%s0 + $0x11c] sm:$0x1]
    %v90 = vld [vmem:[%s0 + $0x120] sm:$0xf]
    %v91 = vld [vmem:[%s0 + $0x124] sm:$0xf]
    %v92 = vld [vmem:[%s0 + $0x128] sm:$0x1]
    %v93 = vld [vmem:[%s0 + $0x12c] sm:$0xf]
    %v94 = vld [vmem:[%s0 + $0x130] sm:$0xf]
    %v95 = vld [vmem:[%s0 + $0x134] sm:$0x1]
    %v96 = vld [vmem:[%s0 + $0x138] sm:$0xf]
    %v97 = vld [vmem:[%s0 + $0x13c] sm:$0xf]
    %v98 = vld [vmem:[%s0 + $0x140] sm:$0x1]
    %v99 = vld [vmem:[%s0 + $0x144] sm:$0xf]
    %v100 = vld [vmem:[%s0 + $0x148] sm:$0xf]
    %v101 = vld [vmem:[%s0 + $0x14c] sm:$0x1]
    %v102 = vld [vmem:[%s0 + $0x150] sm:$0xf]
    %v103 = vld [vmem:[%s0 + $0x154] sm:$0xf]
    %v104 = vld [vmem:[%s0 + $0x158] sm:$0x1]
    %v105 = vld [vmem:[%s0 + $0x15c] sm:$0xf]
    %v106 = vld [vmem:[%s0 + $0x160] sm:$0xf]
    %v107 = vld [vmem:[%s0 + $0x164] sm:$0x1]
    %v108 = vld [vmem:[%s0 + $0x168] sm:$0xf]
    %v109 = vld [vmem:[%s0 + $0x16c] sm:$0xf]
    %v110 = vld [vmem:[%s0 + $0x170] sm:$0x1]
    %v111 = vld [vmem:[%s0 + $0x174] sm:$0xf]
    %v112 = vld [vmem:[%s0 + $0x178] sm:$0xf]
    %v113 = vld [vmem:[%s0 + $0x17c] sm:$0x1]
    %v114 = vld [vmem:[%s0 + $0x180] sm:$0xf]
    %v115 = vld [vmem:[%s0 + $0x184] sm:$0xf]
    %v116 = vld [vmem:[%s0 + $0x188] sm:$0x1]
    %v117 = vld [vmem:[%s0 + $0x18c] sm:$0xf]
    %v118 = vld [vmem:[%s0 + $0x190] sm:$0xf]
    %v119 = vld [vmem:[%s0 + $0x194] sm:$0x1]
    %v120 = vld [vmem:[%s0 + $0x198] sm:$0xf]
    %v121 = vld [vmem:[%s0 + $0x19c] sm:$0xf]
    %v122 = vld [vmem:[%s0 + $0x1a0] sm:$0x1]
    %v123 = vld [vmem:[%s0 + $0x1a4] sm:$0xf]
    %v124 = vld [vmem:[%s0 + $0x1a8] sm:$0xf]
    %v125 = vld [vmem:[%s0 + $0x1ac] sm:$0x1]
    %v190 = vunpack.c.l.b16 %v18
    %v191 = vunpack.c.l.b16 %v19
    %v192 = vunpack.c.l.b16 %v21
    %v193 = vunpack.c.l.b16 %v22
    %v194 = vunpack.c.l.b16 %v24
    %v195 = vunpack.c.l.b16 %v25
    %v196 = vunpack.c.l.b16 %v27
    %v197 = vunpack.c.l.b16 %v28
    %v198 = vunpack.c.l.b16 %v30
    %v199 = vunpack.c.l.b16 %v31
    %v200 = vunpack.c.l.b16 %v33
    %v201 = vunpack.c.l.b16 %v34
    %v202 = vunpack.c.l.b16 %v36
    %v203 = vunpack.c.l.b16 %v37
    %v204 = vunpack.c.l.b16 %v39
    %v205 = vunpack.c.l.b16 %v40
    %v206 = vunpack.c.l.b16 %v42
    %v207 = vunpack.c.l.b16 %v43
    %v208 = vunpack.c.l.b16 %v45
    %v209 = vunpack.c.l.b16 %v46
    %v210 = vunpack.c.l.b16 %v48
    %v211 = vunpack.c.l.b16 %v49
    %v212 = vunpack.c.l.b16 %v51
    %v213 = vunpack.c.l.b16 %v52
    %v214 = vunpack.c.l.b16 %v54
    %v215 = vunpack.c.l.b16 %v55
    %v216 = vunpack.c.l.b16 %v57
    %v217 = vunpack.c.l.b16 %v58
    %v218 = vunpack.c.l.b16 %v60
    %v219 = vunpack.c.l.b16 %v61
    %v220 = vunpack.c.l.b16 %v63
    %v221 = vunpack.c.l.b16 %v64
    %v222 = vunpack.c.l.b16 %v72
    %v223 = vunpack.c.l.b16 %v73
    %v224 = vunpack.c.l.b16 %v75
    %v225 = vunpack.c.l.b16 %v76
    %v226 = vunpack.c.l.b16 %v78
    %v227 = vunpack.c.l.b16 %v79
    %v228 = vunpack.c.l.b16 %v81
    %v229 = vunpack.c.l.b16 %v82
    %v230 = vunpack.c.l.b16 %v84
    %v231 = vunpack.c.l.b16 %v85
    %v232 = vunpack.c.l.b16 %v87
    %v233 = vunpack.c.l.b16 %v88
    %v234 = vunpack.c.l.b16 %v90
    %v235 = vunpack.c.l.b16 %v91
    %v236 = vunpack.c.l.b16 %v93
    %v237 = vunpack.c.l.b16 %v94
    %v238 = vunpack.c.l.b16 %v96
    %v239 = vunpack.c.l.b16 %v97
    %v240 = vunpack.c.l.b16 %v99
    %v241 = vunpack.c.l.b16 %v100
    %v242 = vunpack.c.l.b16 %v102
    %v243 = vunpack.c.l.b16 %v103
    %v244 = vunpack.c.l.b16 %v105
    %v245 = vunpack.c.l.b16 %v106
    %v246 = vunpack.c.l.b16 %v108
    %v247 = vunpack.c.l.b16 %v109
    %v248 = vunpack.c.l.b16 %v111
    %v249 = vunpack.c.l.b16 %v112
    %v250 = vunpack.c.l.b16 %v114
    %v251 = vunpack.c.l.b16 %v115
    %v252 = vunpack.c.l.b16 %v117
    %v253 = vunpack.c.l.b16 %v118
    %v254 = vpack.c.b16 %v191, %v190
    %v255 = vpack.c.b16 %v193, %v192
    %v256 = vpack.c.b16 %v195, %v194
    %v257 = vpack.c.b16 %v197, %v196
    %v258 = vpack.c.b16 %v199, %v198
    %v259 = vpack.c.b16 %v201, %v200
    %v260 = vpack.c.b16 %v203, %v202
    %v261 = vpack.c.b16 %v205, %v204
    %v262 = vpack.c.b16 %v207, %v206
    %v263 = vpack.c.b16 %v209, %v208
    %v264 = vpack.c.b16 %v211, %v210
    %v265 = vpack.c.b16 %v213, %v212
    %v266 = vpack.c.b16 %v215, %v214
    %v267 = vpack.c.b16 %v217, %v216
    %v268 = vpack.c.b16 %v219, %v218
    %v269 = vpack.c.b16 %v221, %v220
    %v270 = vpack.c.b16 %v223, %v222
    %v271 = vpack.c.b16 %v225, %v224
    %v272 = vpack.c.b16 %v227, %v226
    %v273 = vpack.c.b16 %v229, %v228
    %v274 = vpack.c.b16 %v231, %v230
    %v275 = vpack.c.b16 %v233, %v232
    %v276 = vpack.c.b16 %v235, %v234
    %v277 = vpack.c.b16 %v237, %v236
    %v278 = vpack.c.b16 %v239, %v238
    %v279 = vpack.c.b16 %v241, %v240
    %v280 = vpack.c.b16 %v243, %v242
    %v281 = vpack.c.b16 %v245, %v244
    %v282 = vpack.c.b16 %v247, %v246
    %v283 = vpack.c.b16 %v249, %v248
    %v284 = vpack.c.b16 %v251, %v250
    %v285 = vpack.c.b16 %v253, %v252
    %v318 = vunpack.c.l.b16 %v20
    %v319 = vunpack.c.l.b16 %v23
    %v320 = vunpack.c.l.b16 %v26
    %v321 = vunpack.c.l.b16 %v29
    %v322 = vunpack.c.l.b16 %v32
    %v323 = vunpack.c.l.b16 %v35
    %v324 = vunpack.c.l.b16 %v38
    %v325 = vunpack.c.l.b16 %v41
    %v326 = vunpack.c.l.b16 %v44
    %v327 = vunpack.c.l.b16 %v47
    %v328 = vunpack.c.l.b16 %v50
    %v329 = vunpack.c.l.b16 %v53
    %v330 = vunpack.c.l.b16 %v56
    %v331 = vunpack.c.l.b16 %v59
    %v332 = vunpack.c.l.b16 %v62
    %v333 = vunpack.c.l.b16 %v65
    %v334 = vunpack.c.l.b16 %v74
    %v335 = vunpack.c.l.b16 %v77
    %v336 = vunpack.c.l.b16 %v80
    %v337 = vunpack.c.l.b16 %v83
    %v338 = vunpack.c.l.b16 %v86
    %v339 = vunpack.c.l.b16 %v89
    %v340 = vunpack.c.l.b16 %v92
    %v341 = vunpack.c.l.b16 %v95
    %v342 = vunpack.c.l.b16 %v98
    %v343 = vunpack.c.l.b16 %v101
    %v344 = vunpack.c.l.b16 %v104
    %v345 = vunpack.c.l.b16 %v107
    %v346 = vunpack.c.l.b16 %v110
    %v347 = vunpack.c.l.b16 %v113
    %v348 = vunpack.c.l.b16 %v116
    %v349 = vunpack.c.l.b16 %v119
    %v350 = vpack.c.b16 %v318, %v318
    %v351 = vpack.c.b16 %v319, %v319
    %v352 = vpack.c.b16 %v320, %v320
    %v353 = vpack.c.b16 %v321, %v321
    %v354 = vpack.c.b16 %v322, %v322
    %v355 = vpack.c.b16 %v323, %v323
    %v356 = vpack.c.b16 %v324, %v324
    %v357 = vpack.c.b16 %v325, %v325
    %v358 = vpack.c.b16 %v326, %v326
    %v359 = vpack.c.b16 %v327, %v327
    %v360 = vpack.c.b16 %v328, %v328
    %v361 = vpack.c.b16 %v329, %v329
    %v362 = vpack.c.b16 %v330, %v330
    %v363 = vpack.c.b16 %v331, %v331
    %v364 = vpack.c.b16 %v332, %v332
    %v365 = vpack.c.b16 %v333, %v333
    %v366 = vpack.c.b16 %v334, %v334
    %v367 = vpack.c.b16 %v335, %v335
    %v368 = vpack.c.b16 %v336, %v336
    %v369 = vpack.c.b16 %v337, %v337
    %v370 = vpack.c.b16 %v338, %v338
    %v371 = vpack.c.b16 %v339, %v339
    %v372 = vpack.c.b16 %v340, %v340
    %v373 = vpack.c.b16 %v341, %v341
    %v374 = vpack.c.b16 %v342, %v342
    %v375 = vpack.c.b16 %v343, %v343
    %v376 = vpack.c.b16 %v344, %v344
    %v377 = vpack.c.b16 %v345, %v345
    %v378 = vpack.c.b16 %v346, %v346
    %v379 = vpack.c.b16 %v347, %v347
    %v380 = vpack.c.b16 %v348, %v348
    %v381 = vpack.c.b16 %v349, %v349
    %vm382 = vsmask.f32 7424
    %v384 = vshrl.u32 %v254, 16
    %v386 = vshll.u32 %v254, 16
    %v388 = vrot.slane %v386, 1
    %v389 = vor.u32 %v384, %v388
    %v391 = vshll.u32 %v350, 16
    %v393 = vrot.slane %v391, 1
    %v394 = vsel %vm382, %v389, %v393
    %v396 = vshrl.u32 %v255, 16
    %v398 = vshll.u32 %v255, 16
    %v400 = vrot.slane %v398, 1
    %v401 = vor.u32 %v396, %v400
    %v403 = vshll.u32 %v351, 16
    %v405 = vrot.slane %v403, 1
    %v406 = vsel %vm382, %v401, %v405
    %v408 = vshrl.u32 %v256, 16
    %v410 = vshll.u32 %v256, 16
    %v412 = vrot.slane %v410, 1
    %v413 = vor.u32 %v408, %v412
    %v415 = vshll.u32 %v352, 16
    %v417 = vrot.slane %v415, 1
    %v418 = vsel %vm382, %v413, %v417
    %v420 = vshrl.u32 %v257, 16
    %v422 = vshll.u32 %v257, 16
    %v424 = vrot.slane %v422, 1
    %v425 = vor.u32 %v420, %v424
    %v427 = vshll.u32 %v353, 16
    %v429 = vrot.slane %v427, 1
    %v430 = vsel %vm382, %v425, %v429
    %v432 = vshrl.u32 %v258, 16
    %v434 = vshll.u32 %v258, 16
    %v436 = vrot.slane %v434, 1
    %v437 = vor.u32 %v432, %v436
    %v439 = vshll.u32 %v354, 16
    %v441 = vrot.slane %v439, 1
    %v442 = vsel %vm382, %v437, %v441
    %v444 = vshrl.u32 %v259, 16
    %v446 = vshll.u32 %v259, 16
    %v448 = vrot.slane %v446, 1
    %v449 = vor.u32 %v444, %v448
    %v451 = vshll.u32 %v355, 16
    %v453 = vrot.slane %v451, 1
    %v454 = vsel %vm382, %v449, %v453
    %v456 = vshrl.u32 %v260, 16
    %v458 = vshll.u32 %v260, 16
    %v460 = vrot.slane %v458, 1
    %v461 = vor.u32 %v456, %v460
    %v463 = vshll.u32 %v356, 16
    %v465 = vrot.slane %v463, 1
    %v466 = vsel %vm382, %v461, %v465
    %v468 = vshrl.u32 %v261, 16
    %v470 = vshll.u32 %v261, 16
    %v472 = vrot.slane %v470, 1
    %v473 = vor.u32 %v468, %v472
    %v475 = vshll.u32 %v357, 16
    %v477 = vrot.slane %v475, 1
    %v478 = vsel %vm382, %v473, %v477
    %v480 = vshrl.u32 %v262, 16
    %v482 = vshll.u32 %v262, 16
    %v484 = vrot.slane %v482, 1
    %v485 = vor.u32 %v480, %v484
    %v487 = vshll.u32 %v358, 16
    %v489 = vrot.slane %v487, 1
    %v490 = vsel %vm382, %v485, %v489
    %v492 = vshrl.u32 %v263, 16
    %v494 = vshll.u32 %v263, 16
    %v496 = vrot.slane %v494, 1
    %v497 = vor.u32 %v492, %v496
    %v499 = vshll.u32 %v359, 16
    %v501 = vrot.slane %v499, 1
    %v502 = vsel %vm382, %v497, %v501
    %v504 = vshrl.u32 %v264, 16
    %v506 = vshll.u32 %v264, 16
    %v508 = vrot.slane %v506, 1
    %v509 = vor.u32 %v504, %v508
    %v511 = vshll.u32 %v360, 16
    %v513 = vrot.slane %v511, 1
    %v514 = vsel %vm382, %v509, %v513
    %v516 = vshrl.u32 %v265, 16
    %v518 = vshll.u32 %v265, 16
    %v520 = vrot.slane %v518, 1
    %v521 = vor.u32 %v516, %v520
    %v523 = vshll.u32 %v361, 16
    %v525 = vrot.slane %v523, 1
    %v526 = vsel %vm382, %v521, %v525
    %v528 = vshrl.u32 %v266, 16
    %v530 = vshll.u32 %v266, 16
    %v532 = vrot.slane %v530, 1
    %v533 = vor.u32 %v528, %v532
    %v535 = vshll.u32 %v362, 16
    %v537 = vrot.slane %v535, 1
    %v538 = vsel %vm382, %v533, %v537
    %v540 = vshrl.u32 %v267, 16
    %v542 = vshll.u32 %v267, 16
    %v544 = vrot.slane %v542, 1
    %v545 = vor.u32 %v540, %v544
    %v547 = vshll.u32 %v363, 16
    %v549 = vrot.slane %v547, 1
    %v550 = vsel %vm382, %v545, %v549
    %v552 = vshrl.u32 %v268, 16
    %v554 = vshll.u32 %v268, 16
    %v556 = vrot.slane %v554, 1
    %v557 = vor.u32 %v552, %v556
    %v559 = vshll.u32 %v364, 16
    %v561 = vrot.slane %v559, 1
    %v562 = vsel %vm382, %v557, %v561
    %v564 = vshrl.u32 %v269, 16
    %v566 = vshll.u32 %v269, 16
    %v568 = vrot.slane %v566, 1
    %v569 = vor.u32 %v564, %v568
    %v571 = vshll.u32 %v365, 16
    %v573 = vrot.slane %v571, 1
    %v574 = vsel %vm382, %v569, %v573
    %v576 = vshrl.u32 %v270, 16
    %v578 = vshll.u32 %v270, 16
    %v580 = vrot.slane %v578, 1
    %v581 = vor.u32 %v576, %v580
    %v583 = vshll.u32 %v366, 16
    %v585 = vrot.slane %v583, 1
    %v586 = vsel %vm382, %v581, %v585
    %v588 = vshrl.u32 %v271, 16
    %v590 = vshll.u32 %v271, 16
    %v592 = vrot.slane %v590, 1
    %v593 = vor.u32 %v588, %v592
    %v595 = vshll.u32 %v367, 16
    %v597 = vrot.slane %v595, 1
    %v598 = vsel %vm382, %v593, %v597
    %v600 = vshrl.u32 %v272, 16
    %v602 = vshll.u32 %v272, 16
    %v604 = vrot.slane %v602, 1
    %v605 = vor.u32 %v600, %v604
    %v607 = vshll.u32 %v368, 16
    %v609 = vrot.slane %v607, 1
    %v610 = vsel %vm382, %v605, %v609
    %v612 = vshrl.u32 %v273, 16
    %v614 = vshll.u32 %v273, 16
    %v616 = vrot.slane %v614, 1
    %v617 = vor.u32 %v612, %v616
    %v619 = vshll.u32 %v369, 16
    %v621 = vrot.slane %v619, 1
    %v622 = vsel %vm382, %v617, %v621
    %v624 = vshrl.u32 %v274, 16
    %v626 = vshll.u32 %v274, 16
    %v628 = vrot.slane %v626, 1
    %v629 = vor.u32 %v624, %v628
    %v631 = vshll.u32 %v370, 16
    %v633 = vrot.slane %v631, 1
    %v634 = vsel %vm382, %v629, %v633
    %v636 = vshrl.u32 %v275, 16
    %v638 = vshll.u32 %v275, 16
    %v640 = vrot.slane %v638, 1
    %v641 = vor.u32 %v636, %v640
    %v643 = vshll.u32 %v371, 16
    %v645 = vrot.slane %v643, 1
    %v646 = vsel %vm382, %v641, %v645
    %v648 = vshrl.u32 %v276, 16
    %v650 = vshll.u32 %v276, 16
    %v652 = vrot.slane %v650, 1
    %v653 = vor.u32 %v648, %v652
    %v655 = vshll.u32 %v372, 16
    %v657 = vrot.slane %v655, 1
    %v658 = vsel %vm382, %v653, %v657
    %v660 = vshrl.u32 %v277, 16
    %v662 = vshll.u32 %v277, 16
    %v664 = vrot.slane %v662, 1
    %v665 = vor.u32 %v660, %v664
    %v667 = vshll.u32 %v373, 16
    %v669 = vrot.slane %v667, 1
    %v670 = vsel %vm382, %v665, %v669
    %v672 = vshrl.u32 %v278, 16
    %v674 = vshll.u32 %v278, 16
    %v676 = vrot.slane %v674, 1
    %v677 = vor.u32 %v672, %v676
    %v679 = vshll.u32 %v374, 16
    %v681 = vrot.slane %v679, 1
    %v682 = vsel %vm382, %v677, %v681
    %v684 = vshrl.u32 %v279, 16
    %v686 = vshll.u32 %v279, 16
    %v688 = vrot.slane %v686, 1
    %v689 = vor.u32 %v684, %v688
    %v691 = vshll.u32 %v375, 16
    %v693 = vrot.slane %v691, 1
    %v694 = vsel %vm382, %v689, %v693
    %v696 = vshrl.u32 %v280, 16
    %v698 = vshll.u32 %v280, 16
    %v700 = vrot.slane %v698, 1
    %v701 = vor.u32 %v696, %v700
    %v703 = vshll.u32 %v376, 16
    %v705 = vrot.slane %v703, 1
    %v706 = vsel %vm382, %v701, %v705
    %v708 = vshrl.u32 %v281, 16
    %v710 = vshll.u32 %v281, 16
    %v712 = vrot.slane %v710, 1
    %v713 = vor.u32 %v708, %v712
    %v715 = vshll.u32 %v377, 16
    %v717 = vrot.slane %v715, 1
    %v718 = vsel %vm382, %v713, %v717
    %v720 = vshrl.u32 %v282, 16
    %v722 = vshll.u32 %v282, 16
    %v724 = vrot.slane %v722, 1
    %v725 = vor.u32 %v720, %v724
    %v727 = vshll.u32 %v378, 16
    %v729 = vrot.slane %v727, 1
    %v730 = vsel %vm382, %v725, %v729
    %v732 = vshrl.u32 %v283, 16
    %v734 = vshll.u32 %v283, 16
    %v736 = vrot.slane %v734, 1
    %v737 = vor.u32 %v732, %v736
    %v739 = vshll.u32 %v379, 16
    %v741 = vrot.slane %v739, 1
    %v742 = vsel %vm382, %v737, %v741
    %v744 = vshrl.u32 %v284, 16
    %v746 = vshll.u32 %v284, 16
    %v748 = vrot.slane %v746, 1
    %v749 = vor.u32 %v744, %v748
    %v751 = vshll.u32 %v380, 16
    %v753 = vrot.slane %v751, 1
    %v754 = vsel %vm382, %v749, %v753
    %v756 = vshrl.u32 %v285, 16
    %v758 = vshll.u32 %v285, 16
    %v760 = vrot.slane %v758, 1
    %v761 = vor.u32 %v756, %v760
    %v763 = vshll.u32 %v381, 16
    %v765 = vrot.slane %v763, 1
    %v766 = vsel %vm382, %v761, %v765
    %767 = vrot.lane.b32.xlu0 %v394, 4
    %v768 = vpop.permute.xlu0 %767
    %769 = vrot.lane.b32.xlu0 %v406, 4
    %v770 = vpop.permute.xlu0 %769
    %771 = vrot.lane.b32.xlu0 %v418, 4
    %v772 = vpop.permute.xlu0 %771
    %773 = vrot.lane.b32.xlu0 %v430, 4
    %v774 = vpop.permute.xlu0 %773
    %775 = vrot.lane.b32.xlu0 %v442, 4
    %v776 = vpop.permute.xlu0 %775
    %777 = vrot.lane.b32.xlu0 %v454, 4
    %v778 = vpop.permute.xlu0 %777
    %779 = vrot.lane.b32.xlu0 %v466, 4
    %v780 = vpop.permute.xlu0 %779
    %781 = vrot.lane.b32.xlu0 %v478, 4
    %v782 = vpop.permute.xlu0 %781
    %783 = vrot.lane.b32.xlu0 %v490, 4
    %v784 = vpop.permute.xlu0 %783
    %785 = vrot.lane.b32.xlu0 %v502, 4
    %v786 = vpop.permute.xlu0 %785
    %787 = vrot.lane.b32.xlu0 %v514, 4
    %v788 = vpop.permute.xlu0 %787
    %789 = vrot.lane.b32.xlu0 %v526, 4
    %v790 = vpop.permute.xlu0 %789
    %791 = vrot.lane.b32.xlu0 %v538, 4
    %v792 = vpop.permute.xlu0 %791
    %793 = vrot.lane.b32.xlu0 %v550, 4
    %v794 = vpop.permute.xlu0 %793
    %795 = vrot.lane.b32.xlu0 %v562, 4
    %v796 = vpop.permute.xlu0 %795
    %797 = vrot.lane.b32.xlu0 %v574, 4
    %v798 = vpop.permute.xlu0 %797
    %799 = vrot.lane.b32.xlu0 %v586, 4
    %v800 = vpop.permute.xlu0 %799
    %801 = vrot.lane.b32.xlu0 %v598, 4
    %v802 = vpop.permute.xlu0 %801
    %803 = vrot.lane.b32.xlu0 %v610, 4
    %v804 = vpop.permute.xlu0 %803
    %805 = vrot.lane.b32.xlu0 %v622, 4
    %v806 = vpop.permute.xlu0 %805
    %807 = vrot.lane.b32.xlu0 %v634, 4
    %v808 = vpop.permute.xlu0 %807
    %809 = vrot.lane.b32.xlu0 %v646, 4
    %v810 = vpop.permute.xlu0 %809
    %811 = vrot.lane.b32.xlu0 %v658, 4
    %v812 = vpop.permute.xlu0 %811
    %813 = vrot.lane.b32.xlu0 %v670, 4
    %v814 = vpop.permute.xlu0 %813
    %815 = vrot.lane.b32.xlu0 %v682, 4
    %v816 = vpop.permute.xlu0 %815
    %817 = vrot.lane.b32.xlu0 %v694, 4
    %v818 = vpop.permute.xlu0 %817
    %819 = vrot.lane.b32.xlu0 %v706, 4
    %v820 = vpop.permute.xlu0 %819
    %821 = vrot.lane.b32.xlu0 %v718, 4
    %v822 = vpop.permute.xlu0 %821
    %823 = vrot.lane.b32.xlu0 %v730, 4
    %v824 = vpop.permute.xlu0 %823
    %825 = vrot.lane.b32.xlu0 %v742, 4
    %v826 = vpop.permute.xlu0 %825
    %827 = vrot.lane.b32.xlu0 %v754, 4
    %v828 = vpop.permute.xlu0 %827
    %829 = vrot.lane.b32.xlu0 %v766, 4
    %v830 = vpop.permute.xlu0 %829
    %vm831 = vcmask 1046528
    %v832 = vrot.slane %v254, 1
    %v833 = vrot.slane %v350, 1
    %v834 = vsel %vm831, %v832, %v833
    %v835 = vrot.slane %v255, 1
    %v836 = vrot.slane %v351, 1
    %v837 = vsel %vm831, %v835, %v836
    %v838 = vrot.slane %v256, 1
    %v839 = vrot.slane %v352, 1
    %v840 = vsel %vm831, %v838, %v839
    %v841 = vrot.slane %v257, 1
    %v842 = vrot.slane %v353, 1
    %v843 = vsel %vm831, %v841, %v842
    %v844 = vrot.slane %v258, 1
    %v845 = vrot.slane %v354, 1
    %v846 = vsel %vm831, %v844, %v845
    %v847 = vrot.slane %v259, 1
    %v848 = vrot.slane %v355, 1
    %v849 = vsel %vm831, %v847, %v848
    %v850 = vrot.slane %v260, 1
    %v851 = vrot.slane %v356, 1
    %v852 = vsel %vm831, %v850, %v851
    %v853 = vrot.slane %v261, 1
    %v854 = vrot.slane %v357, 1
    %v855 = vsel %vm831, %v853, %v854
    %v856 = vrot.slane %v262, 1
    %v857 = vrot.slane %v358, 1
    %v858 = vsel %vm831, %v856, %v857
    %v859 = vrot.slane %v263, 1
    %v860 = vrot.slane %v359, 1
    %v861 = vsel %vm831, %v859, %v860
    %v862 = vrot.slane %v264, 1
    %v863 = vrot.slane %v360, 1
    %v864 = vsel %vm831, %v862, %v863
    %v865 = vrot.slane %v265, 1
    %v866 = vrot.slane %v361, 1
    %v867 = vsel %vm831, %v865, %v866
    %v868 = vrot.slane %v266, 1
    %v869 = vrot.slane %v362, 1
    %v870 = vsel %vm831, %v868, %v869
    %v871 = vrot.slane %v267, 1
    %v872 = vrot.slane %v363, 1
    %v873 = vsel %vm831, %v871, %v872
    %v874 = vrot.slane %v268, 1
    %v875 = vrot.slane %v364, 1
    %v876 = vsel %vm831, %v874, %v875
    %v877 = vrot.slane %v269, 1
    %v878 = vrot.slane %v365, 1
    %v879 = vsel %vm831, %v877, %v878
    %v880 = vrot.slane %v270, 1
    %v881 = vrot.slane %v366, 1
    %v882 = vsel %vm831, %v880, %v881
    %v883 = vrot.slane %v271, 1
    %v884 = vrot.slane %v367, 1
    %v885 = vsel %vm831, %v883, %v884
    %v886 = vrot.slane %v272, 1
    %v887 = vrot.slane %v368, 1
    %v888 = vsel %vm831, %v886, %v887
    %v889 = vrot.slane %v273, 1
    %v890 = vrot.slane %v369, 1
    %v891 = vsel %vm831, %v889, %v890
    %v892 = vrot.slane %v274, 1
    %v893 = vrot.slane %v370, 1
    %v894 = vsel %vm831, %v892, %v893
    %v895 = vrot.slane %v275, 1
    %v896 = vrot.slane %v371, 1
    %v897 = vsel %vm831, %v895, %v896
    %v898 = vrot.slane %v276, 1
    %v899 = vrot.slane %v372, 1
    %v900 = vsel %vm831, %v898, %v899
    %v901 = vrot.slane %v277, 1
    %v902 = vrot.slane %v373, 1
    %v903 = vsel %vm831, %v901, %v902
    %v904 = vrot.slane %v278, 1
    %v905 = vrot.slane %v374, 1
    %v906 = vsel %vm831, %v904, %v905
    %v907 = vrot.slane %v279, 1
    %v908 = vrot.slane %v375, 1
    %v909 = vsel %vm831, %v907, %v908
    %v910 = vrot.slane %v280, 1
    %v911 = vrot.slane %v376, 1
    %v912 = vsel %vm831, %v910, %v911
    %v913 = vrot.slane %v281, 1
    %v914 = vrot.slane %v377, 1
    %v915 = vsel %vm831, %v913, %v914
    %v916 = vrot.slane %v282, 1
    %v917 = vrot.slane %v378, 1
    %v918 = vsel %vm831, %v916, %v917
    %v919 = vrot.slane %v283, 1
    %v920 = vrot.slane %v379, 1
    %v921 = vsel %vm831, %v919, %v920
    %v922 = vrot.slane %v284, 1
    %v923 = vrot.slane %v380, 1
    %v924 = vsel %vm831, %v922, %v923
    %v925 = vrot.slane %v285, 1
    %v926 = vrot.slane %v381, 1
    %v927 = vsel %vm831, %v925, %v926
    %928 = vrot.lane.b32.xlu0 %v834, 8
    %v929 = vpop.permute.xlu0 %928
    %930 = vrot.lane.b32.xlu0 %v837, 8
    %v931 = vpop.permute.xlu0 %930
    %932 = vrot.lane.b32.xlu0 %v840, 8
    %v933 = vpop.permute.xlu0 %932
    %934 = vrot.lane.b32.xlu0 %v843, 8
    %v935 = vpop.permute.xlu0 %934
    %936 = vrot.lane.b32.xlu0 %v846, 8
    %v937 = vpop.permute.xlu0 %936
    %938 = vrot.lane.b32.xlu0 %v849, 8
    %v939 = vpop.permute.xlu0 %938
    %940 = vrot.lane.b32.xlu0 %v852, 8
    %v941 = vpop.permute.xlu0 %940
    %942 = vrot.lane.b32.xlu0 %v855, 8
    %v943 = vpop.permute.xlu0 %942
    %944 = vrot.lane.b32.xlu0 %v858, 8
    %v945 = vpop.permute.xlu0 %944
    %946 = vrot.lane.b32.xlu0 %v861, 8
    %v947 = vpop.permute.xlu0 %946
    %948 = vrot.lane.b32.xlu0 %v864, 8
    %v949 = vpop.permute.xlu0 %948
    %950 = vrot.lane.b32.xlu0 %v867, 8
    %v951 = vpop.permute.xlu0 %950
    %952 = vrot.lane.b32.xlu0 %v870, 8
    %v953 = vpop.permute.xlu0 %952
    %954 = vrot.lane.b32.xlu0 %v873, 8
    %v955 = vpop.permute.xlu0 %954
    %956 = vrot.lane.b32.xlu0 %v876, 8
    %v957 = vpop.permute.xlu0 %956
    %958 = vrot.lane.b32.xlu0 %v879, 8
    %v959 = vpop.permute.xlu0 %958
    %960 = vrot.lane.b32.xlu0 %v882, 8
    %v961 = vpop.permute.xlu0 %960
    %962 = vrot.lane.b32.xlu0 %v885, 8
    %v963 = vpop.permute.xlu0 %962
    %964 = vrot.lane.b32.xlu0 %v888, 8
    %v965 = vpop.permute.xlu0 %964
    %966 = vrot.lane.b32.xlu0 %v891, 8
    %v967 = vpop.permute.xlu0 %966
    %968 = vrot.lane.b32.xlu0 %v894, 8
    %v969 = vpop.permute.xlu0 %968
    %970 = vrot.lane.b32.xlu0 %v897, 8
    %v971 = vpop.permute.xlu0 %970
    %972 = vrot.lane.b32.xlu0 %v900, 8
    %v973 = vpop.permute.xlu0 %972
    %974 = vrot.lane.b32.xlu0 %v903, 8
    %v975 = vpop.permute.xlu0 %974
    %976 = vrot.lane.b32.xlu0 %v906, 8
    %v977 = vpop.permute.xlu0 %976
    %978 = vrot.lane.b32.xlu0 %v909, 8
    %v979 = vpop.permute.xlu0 %978
    %980 = vrot.lane.b32.xlu0 %v912, 8
    %v981 = vpop.permute.xlu0 %980
    %982 = vrot.lane.b32.xlu0 %v915, 8
    %v983 = vpop.permute.xlu0 %982
    %984 = vrot.lane.b32.xlu0 %v918, 8
    %v985 = vpop.permute.xlu0 %984
    %986 = vrot.lane.b32.xlu0 %v921, 8
    %v987 = vpop.permute.xlu0 %986
    %988 = vrot.lane.b32.xlu0 %v924, 8
    %v989 = vpop.permute.xlu0 %988
    %990 = vrot.lane.b32.xlu0 %v927, 8
    %v991 = vpop.permute.xlu0 %990
    %v996 = vunpack.c.l.b16 %v66
    %v997 = vunpack.c.l.b16 %v67
    %v998 = vunpack.c.l.b16 %v120
    %v999 = vunpack.c.l.b16 %v121
    %v1000 = vpack.c.b16 %v997, %v996
    %v1001 = vpack.c.b16 %v999, %v998
    %1002 = vrot.lane.b32.xlu0 %v255, 12
    %v1003 = vpop.permute.xlu0 %1002
    %1004 = vrot.lane.b32.xlu0 %v256, 12
    %v1005 = vpop.permute.xlu0 %1004
    %1006 = vrot.lane.b32.xlu0 %v257, 12
    %v1007 = vpop.permute.xlu0 %1006
    %1008 = vrot.lane.b32.xlu0 %v258, 12
    %v1009 = vpop.permute.xlu0 %1008
    %1010 = vrot.lane.b32.xlu0 %v259, 12
    %v1011 = vpop.permute.xlu0 %1010
    %1012 = vrot.lane.b32.xlu0 %v260, 12
    %v1013 = vpop.permute.xlu0 %1012
    %1014 = vrot.lane.b32.xlu0 %v261, 12
    %v1015 = vpop.permute.xlu0 %1014
    %1016 = vrot.lane.b32.xlu0 %v262, 12
    %v1017 = vpop.permute.xlu0 %1016
    %1018 = vrot.lane.b32.xlu0 %v263, 12
    %v1019 = vpop.permute.xlu0 %1018
    %1020 = vrot.lane.b32.xlu0 %v264, 12
    %v1021 = vpop.permute.xlu0 %1020
    %1022 = vrot.lane.b32.xlu0 %v265, 12
    %v1023 = vpop.permute.xlu0 %1022
    %1024 = vrot.lane.b32.xlu0 %v266, 12
    %v1025 = vpop.permute.xlu0 %1024
    %1026 = vrot.lane.b32.xlu0 %v267, 12
    %v1027 = vpop.permute.xlu0 %1026
    %1028 = vrot.lane.b32.xlu0 %v268, 12
    %v1029 = vpop.permute.xlu0 %1028
    %1030 = vrot.lane.b32.xlu0 %v269, 12
    %v1031 = vpop.permute.xlu0 %1030
    %1032 = vrot.lane.b32.xlu0 %v1000, 12
    %v1033 = vpop.permute.xlu0 %1032
    %1034 = vrot.lane.b32.xlu0 %v271, 12
    %v1035 = vpop.permute.xlu0 %1034
    %1036 = vrot.lane.b32.xlu0 %v272, 12
    %v1037 = vpop.permute.xlu0 %1036
    %1038 = vrot.lane.b32.xlu0 %v273, 12
    %v1039 = vpop.permute.xlu0 %1038
    %1040 = vrot.lane.b32.xlu0 %v274, 12
    %v1041 = vpop.permute.xlu0 %1040
    %1042 = vrot.lane.b32.xlu0 %v275, 12
    %v1043 = vpop.permute.xlu0 %1042
    %1044 = vrot.lane.b32.xlu0 %v276, 12
    %v1045 = vpop.permute.xlu0 %1044
    %1046 = vrot.lane.b32.xlu0 %v277, 12
    %v1047 = vpop.permute.xlu0 %1046
    %1048 = vrot.lane.b32.xlu0 %v278, 12
    %v1049 = vpop.permute.xlu0 %1048
    %1050 = vrot.lane.b32.xlu0 %v279, 12
    %v1051 = vpop.permute.xlu0 %1050
    %1052 = vrot.lane.b32.xlu0 %v280, 12
    %v1053 = vpop.permute.xlu0 %1052
    %1054 = vrot.lane.b32.xlu0 %v281, 12
    %v1055 = vpop.permute.xlu0 %1054
    %1056 = vrot.lane.b32.xlu0 %v282, 12
    %v1057 = vpop.permute.xlu0 %1056
    %1058 = vrot.lane.b32.xlu0 %v283, 12
    %v1059 = vpop.permute.xlu0 %1058
    %1060 = vrot.lane.b32.xlu0 %v284, 12
    %v1061 = vpop.permute.xlu0 %1060
    %1062 = vrot.lane.b32.xlu0 %v285, 12
    %v1063 = vpop.permute.xlu0 %1062
    %1064 = vrot.lane.b32.xlu0 %v1001, 12
    %v1065 = vpop.permute.xlu0 %1064
    %v1068 = vunpack.c.l.b16 %v68
    %v1069 = vunpack.c.l.b16 %v122
    %v1070 = vpack.c.b16 %v1068, %v1068
    %v1071 = vpack.c.b16 %v1069, %v1069
    %v1073 = vshrl.u32 %v1000, 16
    %v1075 = vshll.u32 %v1000, 16
    %v1077 = vrot.slane %v1075, 1
    %v1078 = vor.u32 %v1073, %v1077
    %v1080 = vshll.u32 %v1070, 16
    %v1082 = vrot.slane %v1080, 1
    %v1083 = vsel %vm382, %v1078, %v1082
    %v1085 = vshrl.u32 %v1001, 16
    %v1087 = vshll.u32 %v1001, 16
    %v1089 = vrot.slane %v1087, 1
    %v1090 = vor.u32 %v1085, %v1089
    %v1092 = vshll.u32 %v1071, 16
    %v1094 = vrot.slane %v1092, 1
    %v1095 = vsel %vm382, %v1090, %v1094
    %1096 = vrot.lane.b32.xlu0 %v406, 16
    %v1097 = vpop.permute.xlu0 %1096
    %1098 = vrot.lane.b32.xlu0 %v418, 16
    %v1099 = vpop.permute.xlu0 %1098
    %1100 = vrot.lane.b32.xlu0 %v430, 16
    %v1101 = vpop.permute.xlu0 %1100
    %1102 = vrot.lane.b32.xlu0 %v442, 16
    %v1103 = vpop.permute.xlu0 %1102
    %1104 = vrot.lane.b32.xlu0 %v454, 16
    %v1105 = vpop.permute.xlu0 %1104
    %1106 = vrot.lane.b32.xlu0 %v466, 16
    %v1107 = vpop.permute.xlu0 %1106
    %1108 = vrot.lane.b32.xlu0 %v478, 16
    %v1109 = vpop.permute.xlu0 %1108
    %1110 = vrot.lane.b32.xlu0 %v490, 16
    %v1111 = vpop.permute.xlu0 %1110
    %1112 = vrot.lane.b32.xlu0 %v502, 16
    %v1113 = vpop.permute.xlu0 %1112
    %1114 = vrot.lane.b32.xlu0 %v514, 16
    %v1115 = vpop.permute.xlu0 %1114
    %1116 = vrot.lane.b32.xlu0 %v526, 16
    %v1117 = vpop.permute.xlu0 %1116
    %1118 = vrot.lane.b32.xlu0 %v538, 16
    %v1119 = vpop.permute.xlu0 %1118
    %1120 = vrot.lane.b32.xlu0 %v550, 16
    %v1121 = vpop.permute.xlu0 %1120
    %1122 = vrot.lane.b32.xlu0 %v562, 16
    %v1123 = vpop.permute.xlu0 %1122
    %1124 = vrot.lane.b32.xlu0 %v574, 16
    %v1125 = vpop.permute.xlu0 %1124
    %1126 = vrot.lane.b32.xlu0 %v1083, 16
    %v1127 = vpop.permute.xlu0 %1126
    %1128 = vrot.lane.b32.xlu0 %v598, 16
    %v1129 = vpop.permute.xlu0 %1128
    %1130 = vrot.lane.b32.xlu0 %v610, 16
    %v1131 = vpop.permute.xlu0 %1130
    %1132 = vrot.lane.b32.xlu0 %v622, 16
    %v1133 = vpop.permute.xlu0 %1132
    %1134 = vrot.lane.b32.xlu0 %v634, 16
    %v1135 = vpop.permute.xlu0 %1134
    %1136 = vrot.lane.b32.xlu0 %v646, 16
    %v1137 = vpop.permute.xlu0 %1136
    %1138 = vrot.lane.b32.xlu0 %v658, 16
    %v1139 = vpop.permute.xlu0 %1138
    %1140 = vrot.lane.b32.xlu0 %v670, 16
    %v1141 = vpop.permute.xlu0 %1140
    %1142 = vrot.lane.b32.xlu0 %v682, 16
    %v1143 = vpop.permute.xlu0 %1142
    %1144 = vrot.lane.b32.xlu0 %v694, 16
    %v1145 = vpop.permute.xlu0 %1144
    %1146 = vrot.lane.b32.xlu0 %v706, 16
    %v1147 = vpop.permute.xlu0 %1146
    %1148 = vrot.lane.b32.xlu0 %v718, 16
    %v1149 = vpop.permute.xlu0 %1148
    %1150 = vrot.lane.b32.xlu0 %v730, 16
    %v1151 = vpop.permute.xlu0 %1150
    %1152 = vrot.lane.b32.xlu0 %v742, 16
    %v1153 = vpop.permute.xlu0 %1152
    %1154 = vrot.lane.b32.xlu0 %v754, 16
    %v1155 = vpop.permute.xlu0 %1154
    %1156 = vrot.lane.b32.xlu0 %v766, 16
    %v1157 = vpop.permute.xlu0 %1156
    %1158 = vrot.lane.b32.xlu0 %v1095, 16
    %v1159 = vpop.permute.xlu0 %1158
    %v1160 = vrot.slane %v1000, 1
    %v1161 = vrot.slane %v1070, 1
    %v1162 = vsel %vm831, %v1160, %v1161
    %v1163 = vrot.slane %v1001, 1
    %v1164 = vrot.slane %v1071, 1
    %v1165 = vsel %vm831, %v1163, %v1164
    %1166 = vrot.lane.b32.xlu0 %v837, 20
    %v1167 = vpop.permute.xlu0 %1166
    %1168 = vrot.lane.b32.xlu0 %v840, 20
    %v1169 = vpop.permute.xlu0 %1168
    %1170 = vrot.lane.b32.xlu0 %v843, 20
    %v1171 = vpop.permute.xlu0 %1170
    %1172 = vrot.lane.b32.xlu0 %v846, 20
    %v1173 = vpop.permute.xlu0 %1172
    %1174 = vrot.lane.b32.xlu0 %v849, 20
    %v1175 = vpop.permute.xlu0 %1174
    %1176 = vrot.lane.b32.xlu0 %v852, 20
    %v1177 = vpop.permute.xlu0 %1176
    %1178 = vrot.lane.b32.xlu0 %v855, 20
    %v1179 = vpop.permute.xlu0 %1178
    %1180 = vrot.lane.b32.xlu0 %v858, 20
    %v1181 = vpop.permute.xlu0 %1180
    %1182 = vrot.lane.b32.xlu0 %v861, 20
    %v1183 = vpop.permute.xlu0 %1182
    %1184 = vrot.lane.b32.xlu0 %v864, 20
    %v1185 = vpop.permute.xlu0 %1184
    %1186 = vrot.lane.b32.xlu0 %v867, 20
    %v1187 = vpop.permute.xlu0 %1186
    %1188 = vrot.lane.b32.xlu0 %v870, 20
    %v1189 = vpop.permute.xlu0 %1188
    %1190 = vrot.lane.b32.xlu0 %v873, 20
    %v1191 = vpop.permute.xlu0 %1190
    %1192 = vrot.lane.b32.xlu0 %v876, 20
    %v1193 = vpop.permute.xlu0 %1192
    %1194 = vrot.lane.b32.xlu0 %v879, 20
    %v1195 = vpop.permute.xlu0 %1194
    %1196 = vrot.lane.b32.xlu0 %v1162, 20
    %v1197 = vpop.permute.xlu0 %1196
    %1198 = vrot.lane.b32.xlu0 %v885, 20
    %v1199 = vpop.permute.xlu0 %1198
    %1200 = vrot.lane.b32.xlu0 %v888, 20
    %v1201 = vpop.permute.xlu0 %1200
    %1202 = vrot.lane.b32.xlu0 %v891, 20
    %v1203 = vpop.permute.xlu0 %1202
    %1204 = vrot.lane.b32.xlu0 %v894, 20
    %v1205 = vpop.permute.xlu0 %1204
    %1206 = vrot.lane.b32.xlu0 %v897, 20
    %v1207 = vpop.permute.xlu0 %1206
    %1208 = vrot.lane.b32.xlu0 %v900, 20
    %v1209 = vpop.permute.xlu0 %1208
    %1210 = vrot.lane.b32.xlu0 %v903, 20
    %v1211 = vpop.permute.xlu0 %1210
    %1212 = vrot.lane.b32.xlu0 %v906, 20
    %v1213 = vpop.permute.xlu0 %1212
    %1214 = vrot.lane.b32.xlu0 %v909, 20
    %v1215 = vpop.permute.xlu0 %1214
    %1216 = vrot.lane.b32.xlu0 %v912, 20
    %v1217 = vpop.permute.xlu0 %1216
    %1218 = vrot.lane.b32.xlu0 %v915, 20
    %v1219 = vpop.permute.xlu0 %1218
    %1220 = vrot.lane.b32.xlu0 %v918, 20
    %v1221 = vpop.permute.xlu0 %1220
    %1222 = vrot.lane.b32.xlu0 %v921, 20
    %v1223 = vpop.permute.xlu0 %1222
    %1224 = vrot.lane.b32.xlu0 %v924, 20
    %v1225 = vpop.permute.xlu0 %1224
    %1226 = vrot.lane.b32.xlu0 %v927, 20
    %v1227 = vpop.permute.xlu0 %1226
    %1228 = vrot.lane.b32.xlu0 %v1165, 20
    %v1229 = vpop.permute.xlu0 %1228
    %v1234 = vunpack.c.l.b16 %v69
    %v1235 = vunpack.c.l.b16 %v70
    %v1236 = vunpack.c.l.b16 %v123
    %v1237 = vunpack.c.l.b16 %v124
    %v1238 = vpack.c.b16 %v1235, %v1234
    %v1239 = vpack.c.b16 %v1237, %v1236
    %1240 = vrot.lane.b32.xlu0 %v256, 24
    %v1241 = vpop.permute.xlu0 %1240
    %1242 = vrot.lane.b32.xlu0 %v257, 24
    %v1243 = vpop.permute.xlu0 %1242
    %1244 = vrot.lane.b32.xlu0 %v258, 24
    %v1245 = vpop.permute.xlu0 %1244
    %1246 = vrot.lane.b32.xlu0 %v259, 24
    %v1247 = vpop.permute.xlu0 %1246
    %1248 = vrot.lane.b32.xlu0 %v260, 24
    %v1249 = vpop.permute.xlu0 %1248
    %1250 = vrot.lane.b32.xlu0 %v261, 24
    %v1251 = vpop.permute.xlu0 %1250
    %1252 = vrot.lane.b32.xlu0 %v262, 24
    %v1253 = vpop.permute.xlu0 %1252
    %1254 = vrot.lane.b32.xlu0 %v263, 24
    %v1255 = vpop.permute.xlu0 %1254
    %1256 = vrot.lane.b32.xlu0 %v264, 24
    %v1257 = vpop.permute.xlu0 %1256
    %1258 = vrot.lane.b32.xlu0 %v265, 24
    %v1259 = vpop.permute.xlu0 %1258
    %1260 = vrot.lane.b32.xlu0 %v266, 24
    %v1261 = vpop.permute.xlu0 %1260
    %1262 = vrot.lane.b32.xlu0 %v267, 24
    %v1263 = vpop.permute.xlu0 %1262
    %1264 = vrot.lane.b32.xlu0 %v268, 24
    %v1265 = vpop.permute.xlu0 %1264
    %1266 = vrot.lane.b32.xlu0 %v269, 24
    %v1267 = vpop.permute.xlu0 %1266
    %1268 = vrot.lane.b32.xlu0 %v1000, 24
    %v1269 = vpop.permute.xlu0 %1268
    %1270 = vrot.lane.b32.xlu0 %v1238, 24
    %v1271 = vpop.permute.xlu0 %1270
    %1272 = vrot.lane.b32.xlu0 %v272, 24
    %v1273 = vpop.permute.xlu0 %1272
    %1274 = vrot.lane.b32.xlu0 %v273, 24
    %v1275 = vpop.permute.xlu0 %1274
    %1276 = vrot.lane.b32.xlu0 %v274, 24
    %v1277 = vpop.permute.xlu0 %1276
    %1278 = vrot.lane.b32.xlu0 %v275, 24
    %v1279 = vpop.permute.xlu0 %1278
    %1280 = vrot.lane.b32.xlu0 %v276, 24
    %v1281 = vpop.permute.xlu0 %1280
    %1282 = vrot.lane.b32.xlu0 %v277, 24
    %v1283 = vpop.permute.xlu0 %1282
    %1284 = vrot.lane.b32.xlu0 %v278, 24
    %v1285 = vpop.permute.xlu0 %1284
    %1286 = vrot.lane.b32.xlu0 %v279, 24
    %v1287 = vpop.permute.xlu0 %1286
    %1288 = vrot.lane.b32.xlu0 %v280, 24
    %v1289 = vpop.permute.xlu0 %1288
    %1290 = vrot.lane.b32.xlu0 %v281, 24
    %v1291 = vpop.permute.xlu0 %1290
    %1292 = vrot.lane.b32.xlu0 %v282, 24
    %v1293 = vpop.permute.xlu0 %1292
    %1294 = vrot.lane.b32.xlu0 %v283, 24
    %v1295 = vpop.permute.xlu0 %1294
    %1296 = vrot.lane.b32.xlu0 %v284, 24
    %v1297 = vpop.permute.xlu0 %1296
    %1298 = vrot.lane.b32.xlu0 %v285, 24
    %v1299 = vpop.permute.xlu0 %1298
    %1300 = vrot.lane.b32.xlu0 %v1001, 24
    %v1301 = vpop.permute.xlu0 %1300
    %1302 = vrot.lane.b32.xlu0 %v1239, 24
    %v1303 = vpop.permute.xlu0 %1302
    %v1306 = vunpack.c.l.b16 %v71
    %v1307 = vunpack.c.l.b16 %v125
    %v1308 = vpack.c.b16 %v1306, %v1306
    %v1309 = vpack.c.b16 %v1307, %v1307
    %v1311 = vshrl.u32 %v1238, 16
    %v1313 = vshll.u32 %v1238, 16
    %v1315 = vrot.slane %v1313, 1
    %v1316 = vor.u32 %v1311, %v1315
    %v1318 = vshll.u32 %v1308, 16
    %v1320 = vrot.slane %v1318, 1
    %v1321 = vsel %vm382, %v1316, %v1320
    %v1323 = vshrl.u32 %v1239, 16
    %v1325 = vshll.u32 %v1239, 16
    %v1327 = vrot.slane %v1325, 1
    %v1328 = vor.u32 %v1323, %v1327
    %v1330 = vshll.u32 %v1309, 16
    %v1332 = vrot.slane %v1330, 1
    %v1333 = vsel %vm382, %v1328, %v1332
    %1334 = vrot.lane.b32.xlu0 %v418, 28
    %v1335 = vpop.permute.xlu0 %1334
    %1336 = vrot.lane.b32.xlu0 %v430, 28
    %v1337 = vpop.permute.xlu0 %1336
    %1338 = vrot.lane.b32.xlu0 %v442, 28
    %v1339 = vpop.permute.xlu0 %1338
    %1340 = vrot.lane.b32.xlu0 %v454, 28
    %v1341 = vpop.permute.xlu0 %1340
    %1342 = vrot.lane.b32.xlu0 %v466, 28
    %v1343 = vpop.permute.xlu0 %1342
    %1344 = vrot.lane.b32.xlu0 %v478, 28
    %v1345 = vpop.permute.xlu0 %1344
    %1346 = vrot.lane.b32.xlu0 %v490, 28
    %v1347 = vpop.permute.xlu0 %1346
    %1348 = vrot.lane.b32.xlu0 %v502, 28
    %v1349 = vpop.permute.xlu0 %1348
    %1350 = vrot.lane.b32.xlu0 %v514, 28
    %v1351 = vpop.permute.xlu0 %1350
    %1352 = vrot.lane.b32.xlu0 %v526, 28
    %v1353 = vpop.permute.xlu0 %1352
    %1354 = vrot.lane.b32.xlu0 %v538, 28
    %v1355 = vpop.permute.xlu0 %1354
    %1356 = vrot.lane.b32.xlu0 %v550, 28
    %v1357 = vpop.permute.xlu0 %1356
    %1358 = vrot.lane.b32.xlu0 %v562, 28
    %v1359 = vpop.permute.xlu0 %1358
    %1360 = vrot.lane.b32.xlu0 %v574, 28
    %v1361 = vpop.permute.xlu0 %1360
    %1362 = vrot.lane.b32.xlu0 %v1083, 28
    %v1363 = vpop.permute.xlu0 %1362
    %1364 = vrot.lane.b32.xlu0 %v1321, 28
    %v1365 = vpop.permute.xlu0 %1364
    %1366 = vrot.lane.b32.xlu0 %v610, 28
    %v1367 = vpop.permute.xlu0 %1366
    %1368 = vrot.lane.b32.xlu0 %v622, 28
    %v1369 = vpop.permute.xlu0 %1368
    %1370 = vrot.lane.b32.xlu0 %v634, 28
    %v1371 = vpop.permute.xlu0 %1370
    %1372 = vrot.lane.b32.xlu0 %v646, 28
    %v1373 = vpop.permute.xlu0 %1372
    %1374 = vrot.lane.b32.xlu0 %v658, 28
    %v1375 = vpop.permute.xlu0 %1374
    %1376 = vrot.lane.b32.xlu0 %v670, 28
    %v1377 = vpop.permute.xlu0 %1376
    %1378 = vrot.lane.b32.xlu0 %v682, 28
    %v1379 = vpop.permute.xlu0 %1378
    %1380 = vrot.lane.b32.xlu0 %v694, 28
    %v1381 = vpop.permute.xlu0 %1380
    %1382 = vrot.lane.b32.xlu0 %v706, 28
    %v1383 = vpop.permute.xlu0 %1382
    %1384 = vrot.lane.b32.xlu0 %v718, 28
    %v1385 = vpop.permute.xlu0 %1384
    %1386 = vrot.lane.b32.xlu0 %v730, 28
    %v1387 = vpop.permute.xlu0 %1386
    %1388 = vrot.lane.b32.xlu0 %v742, 28
    %v1389 = vpop.permute.xlu0 %1388
    %1390 = vrot.lane.b32.xlu0 %v754, 28
    %v1391 = vpop.permute.xlu0 %1390
    %1392 = vrot.lane.b32.xlu0 %v766, 28
    %v1393 = vpop.permute.xlu0 %1392
    %1394 = vrot.lane.b32.xlu0 %v1095, 28
    %v1395 = vpop.permute.xlu0 %1394
    %1396 = vrot.lane.b32.xlu0 %v1333, 28
    %v1397 = vpop.permute.xlu0 %1396
    %v1398 = vrot.slane %v1238, 1
    %v1399 = vrot.slane %v1308, 1
    %v1400 = vsel %vm831, %v1398, %v1399
    %v1401 = vrot.slane %v1239, 1
    %v1402 = vrot.slane %v1309, 1
    %v1403 = vsel %vm831, %v1401, %v1402
    %1404 = vrot.lane.b32.xlu0 %v840, 32
    %v1405 = vpop.permute.xlu0 %1404
    %1406 = vrot.lane.b32.xlu0 %v843, 32
    %v1407 = vpop.permute.xlu0 %1406
    %1408 = vrot.lane.b32.xlu0 %v846, 32
    %v1409 = vpop.permute.xlu0 %1408
    %1410 = vrot.lane.b32.xlu0 %v849, 32
    %v1411 = vpop.permute.xlu0 %1410
    %1412 = vrot.lane.b32.xlu0 %v852, 32
    %v1413 = vpop.permute.xlu0 %1412
    %1414 = vrot.lane.b32.xlu0 %v855, 32
    %v1415 = vpop.permute.xlu0 %1414
    %1416 = vrot.lane.b32.xlu0 %v858, 32
    %v1417 = vpop.permute.xlu0 %1416
    %1418 = vrot.lane.b32.xlu0 %v861, 32
    %v1419 = vpop.permute.xlu0 %1418
    %1420 = vrot.lane.b32.xlu0 %v864, 32
    %v1421 = vpop.permute.xlu0 %1420
    %1422 = vrot.lane.b32.xlu0 %v867, 32
    %v1423 = vpop.permute.xlu0 %1422
    %1424 = vrot.lane.b32.xlu0 %v870, 32
    %v1425 = vpop.permute.xlu0 %1424
    %1426 = vrot.lane.b32.xlu0 %v873, 32
    %v1427 = vpop.permute.xlu0 %1426
    %1428 = vrot.lane.b32.xlu0 %v876, 32
    %v1429 = vpop.permute.xlu0 %1428
    %1430 = vrot.lane.b32.xlu0 %v879, 32
    %v1431 = vpop.permute.xlu0 %1430
    %1432 = vrot.lane.b32.xlu0 %v1162, 32
    %v1433 = vpop.permute.xlu0 %1432
    %1434 = vrot.lane.b32.xlu0 %v1400, 32
    %v1435 = vpop.permute.xlu0 %1434
    %1436 = vrot.lane.b32.xlu0 %v888, 32
    %v1437 = vpop.permute.xlu0 %1436
    %1438 = vrot.lane.b32.xlu0 %v891, 32
    %v1439 = vpop.permute.xlu0 %1438
    %1440 = vrot.lane.b32.xlu0 %v894, 32
    %v1441 = vpop.permute.xlu0 %1440
    %1442 = vrot.lane.b32.xlu0 %v897, 32
    %v1443 = vpop.permute.xlu0 %1442
    %1444 = vrot.lane.b32.xlu0 %v900, 32
    %v1445 = vpop.permute.xlu0 %1444
    %1446 = vrot.lane.b32.xlu0 %v903, 32
    %v1447 = vpop.permute.xlu0 %1446
    %1448 = vrot.lane.b32.xlu0 %v906, 32
    %v1449 = vpop.permute.xlu0 %1448
    %1450 = vrot.lane.b32.xlu0 %v909, 32
    %v1451 = vpop.permute.xlu0 %1450
    %1452 = vrot.lane.b32.xlu0 %v912, 32
    %v1453 = vpop.permute.xlu0 %1452
    %1454 = vrot.lane.b32.xlu0 %v915, 32
    %v1455 = vpop.permute.xlu0 %1454
    %1456 = vrot.lane.b32.xlu0 %v918, 32
    %v1457 = vpop.permute.xlu0 %1456
    %1458 = vrot.lane.b32.xlu0 %v921, 32
    %v1459 = vpop.permute.xlu0 %1458
    %1460 = vrot.lane.b32.xlu0 %v924, 32
    %v1461 = vpop.permute.xlu0 %1460
    %1462 = vrot.lane.b32.xlu0 %v927, 32
    %v1463 = vpop.permute.xlu0 %1462
    %1464 = vrot.lane.b32.xlu0 %v1165, 32
    %v1465 = vpop.permute.xlu0 %1464
    %1466 = vrot.lane.b32.xlu0 %v1403, 32
    %v1467 = vpop.permute.xlu0 %1466
    %vm1468 = vcmask 31744
    %v1470 = vsel %vm1468, %v254, %v768
    %v1472 = vsel %vm1468, %v255, %v770
    %v1474 = vsel %vm1468, %v256, %v772
    %v1476 = vsel %vm1468, %v257, %v774
    %v1478 = vsel %vm1468, %v258, %v776
    %v1480 = vsel %vm1468, %v259, %v778
    %v1482 = vsel %vm1468, %v260, %v780
    %v1484 = vsel %vm1468, %v261, %v782
    %v1486 = vsel %vm1468, %v262, %v784
    %v1488 = vsel %vm1468, %v263, %v786
    %v1490 = vsel %vm1468, %v264, %v788
    %v1492 = vsel %vm1468, %v265, %v790
    %v1494 = vsel %vm1468, %v266, %v792
    %v1496 = vsel %vm1468, %v267, %v794
    %v1498 = vsel %vm1468, %v268, %v796
    %v1500 = vsel %vm1468, %v269, %v798
    %v1502 = vsel %vm1468, %v270, %v800
    %v1504 = vsel %vm1468, %v271, %v802
    %v1506 = vsel %vm1468, %v272, %v804
    %v1508 = vsel %vm1468, %v273, %v806
    %v1510 = vsel %vm1468, %v274, %v808
    %v1512 = vsel %vm1468, %v275, %v810
    %v1514 = vsel %vm1468, %v276, %v812
    %v1516 = vsel %vm1468, %v277, %v814
    %v1518 = vsel %vm1468, %v278, %v816
    %v1520 = vsel %vm1468, %v279, %v818
    %v1522 = vsel %vm1468, %v280, %v820
    %v1524 = vsel %vm1468, %v281, %v822
    %v1526 = vsel %vm1468, %v282, %v824
    %v1528 = vsel %vm1468, %v283, %v826
    %v1530 = vsel %vm1468, %v284, %v828
    %v1532 = vsel %vm1468, %v285, %v830
    %vm1533 = vcmask 64512
    %v1535 = vsel %vm1533, %v1470, %v929
    %v1537 = vsel %vm1533, %v1472, %v931
    %v1539 = vsel %vm1533, %v1474, %v933
    %v1541 = vsel %vm1533, %v1476, %v935
    %v1543 = vsel %vm1533, %v1478, %v937
    %v1545 = vsel %vm1533, %v1480, %v939
    %v1547 = vsel %vm1533, %v1482, %v941
    %v1549 = vsel %vm1533, %v1484, %v943
    %v1551 = vsel %vm1533, %v1486, %v945
    %v1553 = vsel %vm1533, %v1488, %v947
    %v1555 = vsel %vm1533, %v1490, %v949
    %v1557 = vsel %vm1533, %v1492, %v951
    %v1559 = vsel %vm1533, %v1494, %v953
    %v1561 = vsel %vm1533, %v1496, %v955
    %v1563 = vsel %vm1533, %v1498, %v957
    %v1565 = vsel %vm1533, %v1500, %v959
    %v1567 = vsel %vm1533, %v1502, %v961
    %v1569 = vsel %vm1533, %v1504, %v963
    %v1571 = vsel %vm1533, %v1506, %v965
    %v1573 = vsel %vm1533, %v1508, %v967
    %v1575 = vsel %vm1533, %v1510, %v969
    %v1577 = vsel %vm1533, %v1512, %v971
    %v1579 = vsel %vm1533, %v1514, %v973
    %v1581 = vsel %vm1533, %v1516, %v975
    %v1583 = vsel %vm1533, %v1518, %v977
    %v1585 = vsel %vm1533, %v1520, %v979
    %v1587 = vsel %vm1533, %v1522, %v981
    %v1589 = vsel %vm1533, %v1524, %v983
    %v1591 = vsel %vm1533, %v1526, %v985
    %v1593 = vsel %vm1533, %v1528, %v987
    %v1595 = vsel %vm1533, %v1530, %v989
    %v1597 = vsel %vm1533, %v1532, %v991
    %vm1598 = vcmask 97280
    %v1600 = vsel %vm1598, %v1535, %v1003
    %v1602 = vsel %vm1598, %v1537, %v1005
    %v1604 = vsel %vm1598, %v1539, %v1007
    %v1606 = vsel %vm1598, %v1541, %v1009
    %v1608 = vsel %vm1598, %v1543, %v1011
    %v1610 = vsel %vm1598, %v1545, %v1013
    %v1612 = vsel %vm1598, %v1547, %v1015
    %v1614 = vsel %vm1598, %v1549, %v1017
    %v1616 = vsel %vm1598, %v1551, %v1019
    %v1618 = vsel %vm1598, %v1553, %v1021
    %v1620 = vsel %vm1598, %v1555, %v1023
    %v1622 = vsel %vm1598, %v1557, %v1025
    %v1624 = vsel %vm1598, %v1559, %v1027
    %v1626 = vsel %vm1598, %v1561, %v1029
    %v1628 = vsel %vm1598, %v1563, %v1031
    %v1630 = vsel %vm1598, %v1565, %v1033
    %v1632 = vsel %vm1598, %v1567, %v1035
    %v1634 = vsel %vm1598, %v1569, %v1037
    %v1636 = vsel %vm1598, %v1571, %v1039
    %v1638 = vsel %vm1598, %v1573, %v1041
    %v1640 = vsel %vm1598, %v1575, %v1043
    %v1642 = vsel %vm1598, %v1577, %v1045
    %v1644 = vsel %vm1598, %v1579, %v1047
    %v1646 = vsel %vm1598, %v1581, %v1049
    %v1648 = vsel %vm1598, %v1583, %v1051
    %v1650 = vsel %vm1598, %v1585, %v1053
    %v1652 = vsel %vm1598, %v1587, %v1055
    %v1654 = vsel %vm1598, %v1589, %v1057
    %v1656 = vsel %vm1598, %v1591, %v1059
    %v1658 = vsel %vm1598, %v1593, %v1061
    %v1660 = vsel %vm1598, %v1595, %v1063
    %v1662 = vsel %vm1598, %v1597, %v1065
    %vm1663 = vcmask 130048
    %v1665 = vsel %vm1663, %v1600, %v1097
    %v1667 = vsel %vm1663, %v1602, %v1099
    %v1669 = vsel %vm1663, %v1604, %v1101
    %v1671 = vsel %vm1663, %v1606, %v1103
    %v1673 = vsel %vm1663, %v1608, %v1105
    %v1675 = vsel %vm1663, %v1610, %v1107
    %v1677 = vsel %vm1663, %v1612, %v1109
    %v1679 = vsel %vm1663, %v1614, %v1111
    %v1681 = vsel %vm1663, %v1616, %v1113
    %v1683 = vsel %vm1663, %v1618, %v1115
    %v1685 = vsel %vm1663, %v1620, %v1117
    %v1687 = vsel %vm1663, %v1622, %v1119
    %v1689 = vsel %vm1663, %v1624, %v1121
    %v1691 = vsel %vm1663, %v1626, %v1123
    %v1693 = vsel %vm1663, %v1628, %v1125
    %v1695 = vsel %vm1663, %v1630, %v1127
    %v1697 = vsel %vm1663, %v1632, %v1129
    %v1699 = vsel %vm1663, %v1634, %v1131
    %v1701 = vsel %vm1663, %v1636, %v1133
    %v1703 = vsel %vm1663, %v1638, %v1135
    %v1705 = vsel %vm1663, %v1640, %v1137
    %v1707 = vsel %vm1663, %v1642, %v1139
    %v1709 = vsel %vm1663, %v1644, %v1141
    %v1711 = vsel %vm1663, %v1646, %v1143
    %v1713 = vsel %vm1663, %v1648, %v1145
    %v1715 = vsel %vm1663, %v1650, %v1147
    %v1717 = vsel %vm1663, %v1652, %v1149
    %v1719 = vsel %vm1663, %v1654, %v1151
    %v1721 = vsel %vm1663, %v1656, %v1153
    %v1723 = vsel %vm1663, %v1658, %v1155
    %v1725 = vsel %vm1663, %v1660, %v1157
    %v1727 = vsel %vm1663, %v1662, %v1159
    %vm1728 = vcmask 162816
    %v1730 = vsel %vm1728, %v1665, %v1167
    %v1732 = vsel %vm1728, %v1667, %v1169
    %v1734 = vsel %vm1728, %v1669, %v1171
    %v1736 = vsel %vm1728, %v1671, %v1173
    %v1738 = vsel %vm1728, %v1673, %v1175
    %v1740 = vsel %vm1728, %v1675, %v1177
    %v1742 = vsel %vm1728, %v1677, %v1179
    %v1744 = vsel %vm1728, %v1679, %v1181
    %v1746 = vsel %vm1728, %v1681, %v1183
    %v1748 = vsel %vm1728, %v1683, %v1185
    %v1750 = vsel %vm1728, %v1685, %v1187
    %v1752 = vsel %vm1728, %v1687, %v1189
    %v1754 = vsel %vm1728, %v1689, %v1191
    %v1756 = vsel %vm1728, %v1691, %v1193
    %v1758 = vsel %vm1728, %v1693, %v1195
    %v1760 = vsel %vm1728, %v1695, %v1197
    %v1762 = vsel %vm1728, %v1697, %v1199
    %v1764 = vsel %vm1728, %v1699, %v1201
    %v1766 = vsel %vm1728, %v1701, %v1203
    %v1768 = vsel %vm1728, %v1703, %v1205
    %v1770 = vsel %vm1728, %v1705, %v1207
    %v1772 = vsel %vm1728, %v1707, %v1209
    %v1774 = vsel %vm1728, %v1709, %v1211
    %v1776 = vsel %vm1728, %v1711, %v1213
    %v1778 = vsel %vm1728, %v1713, %v1215
    %v1780 = vsel %vm1728, %v1715, %v1217
    %v1782 = vsel %vm1728, %v1717, %v1219
    %v1784 = vsel %vm1728, %v1719, %v1221
    %v1786 = vsel %vm1728, %v1721, %v1223
    %v1788 = vsel %vm1728, %v1723, %v1225
    %v1790 = vsel %vm1728, %v1725, %v1227
    %v1792 = vsel %vm1728, %v1727, %v1229
    %vm1793 = vcmask 195584
    %v1795 = vsel %vm1793, %v1730, %v1241
    %v1797 = vsel %vm1793, %v1732, %v1243
    %v1799 = vsel %vm1793, %v1734, %v1245
    %v1801 = vsel %vm1793, %v1736, %v1247
    %v1803 = vsel %vm1793, %v1738, %v1249
    %v1805 = vsel %vm1793, %v1740, %v1251
    %v1807 = vsel %vm1793, %v1742, %v1253
    %v1809 = vsel %vm1793, %v1744, %v1255
    %v1811 = vsel %vm1793, %v1746, %v1257
    %v1813 = vsel %vm1793, %v1748, %v1259
    %v1815 = vsel %vm1793, %v1750, %v1261
    %v1817 = vsel %vm1793, %v1752, %v1263
    %v1819 = vsel %vm1793, %v1754, %v1265
    %v1821 = vsel %vm1793, %v1756, %v1267
    %v1823 = vsel %vm1793, %v1758, %v1269
    %v1825 = vsel %vm1793, %v1760, %v1271
    %v1827 = vsel %vm1793, %v1762, %v1273
    %v1829 = vsel %vm1793, %v1764, %v1275
    %v1831 = vsel %vm1793, %v1766, %v1277
    %v1833 = vsel %vm1793, %v1768, %v1279
    %v1835 = vsel %vm1793, %v1770, %v1281
    %v1837 = vsel %vm1793, %v1772, %v1283
    %v1839 = vsel %vm1793, %v1774, %v1285
    %v1841 = vsel %vm1793, %v1776, %v1287
    %v1843 = vsel %vm1793, %v1778, %v1289
    %v1845 = vsel %vm1793, %v1780, %v1291
    %v1847 = vsel %vm1793, %v1782, %v1293
    %v1849 = vsel %vm1793, %v1784, %v1295
    %v1851 = vsel %vm1793, %v1786, %v1297
    %v1853 = vsel %vm1793, %v1788, %v1299
    %v1855 = vsel %vm1793, %v1790, %v1301
    %v1857 = vsel %vm1793, %v1792, %v1303
    %vm1858 = vcmask 228352
    %v1860 = vsel %vm1858, %v1795, %v1335
    %v1862 = vsel %vm1858, %v1797, %v1337
    %v1864 = vsel %vm1858, %v1799, %v1339
    %v1866 = vsel %vm1858, %v1801, %v1341
    %v1868 = vsel %vm1858, %v1803, %v1343
    %v1870 = vsel %vm1858, %v1805, %v1345
    %v1872 = vsel %vm1858, %v1807, %v1347
    %v1874 = vsel %vm1858, %v1809, %v1349
    %v1876 = vsel %vm1858, %v1811, %v1351
    %v1878 = vsel %vm1858, %v1813, %v1353
    %v1880 = vsel %vm1858, %v1815, %v1355
    %v1882 = vsel %vm1858, %v1817, %v1357
    %v1884 = vsel %vm1858, %v1819, %v1359
    %v1886 = vsel %vm1858, %v1821, %v1361
    %v1888 = vsel %vm1858, %v1823, %v1363
    %v1890 = vsel %vm1858, %v1825, %v1365
    %v1892 = vsel %vm1858, %v1827, %v1367
    %v1894 = vsel %vm1858, %v1829, %v1369
    %v1896 = vsel %vm1858, %v1831, %v1371
    %v1898 = vsel %vm1858, %v1833, %v1373
    %v1900 = vsel %vm1858, %v1835, %v1375
    %v1902 = vsel %vm1858, %v1837, %v1377
    %v1904 = vsel %vm1858, %v1839, %v1379
    %v1906 = vsel %vm1858, %v1841, %v1381
    %v1908 = vsel %vm1858, %v1843, %v1383
    %v1910 = vsel %vm1858, %v1845, %v1385
    %v1912 = vsel %vm1858, %v1847, %v1387
    %v1914 = vsel %vm1858, %v1849, %v1389
    %v1916 = vsel %vm1858, %v1851, %v1391
    %v1918 = vsel %vm1858, %v1853, %v1393
    %v1920 = vsel %vm1858, %v1855, %v1395
    %v1922 = vsel %vm1858, %v1857, %v1397
    %vm1923 = vcmask 261120
    %v1925 = vsel %vm1923, %v1860, %v1405
    %v1927 = vsel %vm1923, %v1862, %v1407
    %v1929 = vsel %vm1923, %v1864, %v1409
    %v1931 = vsel %vm1923, %v1866, %v1411
    %v1933 = vsel %vm1923, %v1868, %v1413
    %v1935 = vsel %vm1923, %v1870, %v1415
    %v1937 = vsel %vm1923, %v1872, %v1417
    %v1939 = vsel %vm1923, %v1874, %v1419
    %v1941 = vsel %vm1923, %v1876, %v1421
    %v1943 = vsel %vm1923, %v1878, %v1423
    %v1945 = vsel %vm1923, %v1880, %v1425
    %v1947 = vsel %vm1923, %v1882, %v1427
    %v1949 = vsel %vm1923, %v1884, %v1429
    %v1951 = vsel %vm1923, %v1886, %v1431
    %v1953 = vsel %vm1923, %v1888, %v1433
    %v1955 = vsel %vm1923, %v1890, %v1435
    %v1957 = vsel %vm1923, %v1892, %v1437
    %v1959 = vsel %vm1923, %v1894, %v1439
    %v1961 = vsel %vm1923, %v1896, %v1441
    %v1963 = vsel %vm1923, %v1898, %v1443
    %v1965 = vsel %vm1923, %v1900, %v1445
    %v1967 = vsel %vm1923, %v1902, %v1447
    %v1969 = vsel %vm1923, %v1904, %v1449
    %v1971 = vsel %vm1923, %v1906, %v1451
    %v1973 = vsel %vm1923, %v1908, %v1453
    %v1975 = vsel %vm1923, %v1910, %v1455
    %v1977 = vsel %vm1923, %v1912, %v1457
    %v1979 = vsel %vm1923, %v1914, %v1459
    %v1981 = vsel %vm1923, %v1916, %v1461
    %v1983 = vsel %vm1923, %v1918, %v1463
    %v1985 = vsel %vm1923, %v1920, %v1465
    %v1987 = vsel %vm1923, %v1922, %v1467
    %v1988 = vld [vmem:[%s1] sm:$0xf]
    %vm1989 = vcmask 293888
    %v1991 = vsel %vm1989, %v1988, 0
    %v1993 = vsel %vm1989, %v1925, 0
    %v1995 = vsel %vm1989, %v1927, 0
    %v1997 = vsel %vm1989, %v1929, 0
    %v1999 = vsel %vm1989, %v1931, 0
    %v2001 = vsel %vm1989, %v1933, 0
    %v2003 = vsel %vm1989, %v1935, 0
    %v2005 = vsel %vm1989, %v1937, 0
    %v2007 = vsel %vm1989, %v1939, 0
    %v2009 = vsel %vm1989, %v1941, 0
    %v2011 = vsel %vm1989, %v1943, 0
    %v2013 = vsel %vm1989, %v1945, 0
    %v2015 = vsel %vm1989, %v1947, 0
    %v2017 = vsel %vm1989, %v1949, 0
    %v2019 = vsel %vm1989, %v1951, 0
    %v2021 = vsel %vm1989, %v1953, 0
    %v2023 = vsel %vm1989, %v1955, 0
    %v2025 = vsel %vm1989, %v1957, 0
    %v2027 = vsel %vm1989, %v1959, 0
    %v2029 = vsel %vm1989, %v1961, 0
    %v2031 = vsel %vm1989, %v1963, 0
    %v2033 = vsel %vm1989, %v1965, 0
    %v2035 = vsel %vm1989, %v1967, 0
    %v2037 = vsel %vm1989, %v1969, 0
    %v2039 = vsel %vm1989, %v1971, 0
    %v2041 = vsel %vm1989, %v1973, 0
    %v2043 = vsel %vm1989, %v1975, 0
    %v2045 = vsel %vm1989, %v1977, 0
    %v2047 = vsel %vm1989, %v1979, 0
    %v2049 = vsel %vm1989, %v1981, 0
    %v2051 = vsel %vm1989, %v1983, 0
    %v2053 = vsel %vm1989, %v1985, 0
    %v2055 = vsel %vm1989, %v1987, 0
    %2057 = vmatpush.bf16.xpose.msra.mxu0 %v2007
    %2058 = vmatpush.bf16.xpose.msra.mxu0 %v2005
    %2059 = vmatpush.bf16.xpose.msra.mxu0 %v2003
    %2060 = vmatpush.bf16.xpose.msra.mxu0 %v2001
    %2061 = vmatpush.bf16.xpose.msra.mxu0 %v1999
    %2062 = vmatpush.bf16.xpose.msra.mxu0 %v1997
    %2063 = vmatpush.bf16.xpose.msra.mxu0 %v1995
    %2064 = vmatpush.bf16.xpose.msra.mxu0 %v1993
    %2065 = vmatmul.bf16.gmra.mxu0 %v1991
    %v2066 = vpop.f32.mrf.mxu0
    %v2067 = vadd.f32 0.0, %v2066
    %v2068 = vpop.f32.mrf.mxu0
    %2069 = vdwg.mxu0
    %2070 = vmatpush.bf16.xpose.msra.mxu0 %v2023
    %2071 = vmatpush.bf16.xpose.msra.mxu0 %v2021
    %2072 = vmatpush.bf16.xpose.msra.mxu0 %v2019
    %2073 = vmatpush.bf16.xpose.msra.mxu0 %v2017
    %2074 = vmatpush.bf16.xpose.msra.mxu0 %v2015
    %2075 = vmatpush.bf16.xpose.msra.mxu0 %v2013
    %2076 = vmatpush.bf16.xpose.msra.mxu0 %v2011
    %2077 = vmatpush.bf16.xpose.msra.mxu0 %v2009
    %2078 = vmatmul.bf16.gmra.mxu0 %v1991
    %v2079 = vpop.f32.mrf.mxu0
    %v2080 = vadd.f32 0.0, %v2079
    %v2081 = vpop.f32.mrf.mxu0
    %2082 = vdwg.mxu0
    %2083 = vmatpush.bf16.xpose.msra.mxu0 %v2039
    %2084 = vmatpush.bf16.xpose.msra.mxu0 %v2037
    %2085 = vmatpush.bf16.xpose.msra.mxu0 %v2035
    %2086 = vmatpush.bf16.xpose.msra.mxu0 %v2033
    %2087 = vmatpush.bf16.xpose.msra.mxu0 %v2031
    %2088 = vmatpush.bf16.xpose.msra.mxu0 %v2029
    %2089 = vmatpush.bf16.xpose.msra.mxu0 %v2027
    %2090 = vmatpush.bf16.xpose.msra.mxu0 %v2025
    %2091 = vmatmul.bf16.gmra.mxu0 %v1991
    %v2092 = vpop.f32.mrf.mxu0
    %v2093 = vadd.f32 0.0, %v2092
    %v2094 = vpop.f32.mrf.mxu0
    %2095 = vdwg.mxu0
    %2096 = vmatpush.bf16.xpose.msra.mxu0 %v2055
    %2097 = vmatpush.bf16.xpose.msra.mxu0 %v2053
    %2098 = vmatpush.bf16.xpose.msra.mxu0 %v2051
    %2099 = vmatpush.bf16.xpose.msra.mxu0 %v2049
    %2100 = vmatpush.bf16.xpose.msra.mxu0 %v2047
    %2101 = vmatpush.bf16.xpose.msra.mxu0 %v2045
    %2102 = vmatpush.bf16.xpose.msra.mxu0 %v2043
    %2103 = vmatpush.bf16.xpose.msra.mxu0 %v2041
    %2104 = vmatmul.bf16.gmra.mxu0 %v1991
    %v2105 = vpop.f32.mrf.mxu0
    %v2106 = vadd.f32 0.0, %v2105
    %v2107 = vpop.f32.mrf.mxu0
    %2108 = vdwg.mxu0
    %v2109 = vadd.f32 %v2067, %v2080
    %v2110 = vadd.f32 %v2109, %v2093
    %v2111 = vadd.f32 %v2110, %v2106
    %2112 = vadd.xlane.f32.xlu0 %v2111
    %v2113 = vpop.xlane.xlu0 %2112
    %v2114 = vmul.f32 %v2067, %v2067
    %v2115 = vmul.f32 %v2080, %v2080
    %v2116 = vmul.f32 %v2093, %v2093
    %v2117 = vmul.f32 %v2106, %v2106
    %v2118 = vadd.f32 %v2114, %v2115
    %v2119 = vadd.f32 %v2118, %v2116
    %v2120 = vadd.f32 %v2119, %v2117
    %2121 = vadd.xlane.f32.xlu0 %v2120
    %v2122 = vpop.xlane.xlu0 %2121
    %v2123 = vmul.f32 %v2113, 0.001953125
    %v2124 = vmul.f32 %v2122, 0.001953125
    %v2125 = vmul.f32 %v2123, %v2123
    %v2126 = vsub.f32 %v2124, %v2125
    %v2127 = vadd.f32 %v2126, 1e-05
    %v2128 = vrsqrt.pop %v2127
    %v2129 = vmul.f32 %v2128, %v2127
    %v2130 = vmul.f32 %v2129, %v2128
    %v2131 = vmul.f32 0.5, %v2130
    %v2132 = vsub.f32 1.5, %v2131
    %v2133 = vmul.f32 %v2128, %v2132
    %vm2134 = vweird.f32 %v2127
    %vm2135 = vweird.f32 %v2128
    %vm2136 = vmor %vm2134, %vm2135
    %v2137 = vsel %vm2136, %v2128, %v2133
    %v2138 = vld [vmem:[%s2] sm:$0xff]
    %v2139 = vmul.f32 %v2138, %v2137
    %v2140 = vld [vmem:[%s3] sm:$0xff]
    %v2141 = vmul.f32 %v2123, %v2139
    %v2142 = vsub.f32 %v2140, %v2141
    %2144 = vset.pattern.permute.xlu0 0
    %2145 = vperm.xlu0 %2144, %v2139
    %v2146 = vpop.permute.xlu0 %2145
    %v2148 = vmul.f32 %v2067, %v2146
    %v2149 = vmul.f32 %v2080, %v2146
    %v2150 = vmul.f32 %v2093, %v2146
    %v2151 = vmul.f32 %v2106, %v2146
    %2153 = vset.pattern.permute.xlu0 0
    %2154 = vperm.xlu0 %2153, %v2142
    %v2155 = vpop.permute.xlu0 %2154
    %v2157 = vadd.f32 %v2148, %v2155
    %v2158 = vadd.f32 %v2149, %v2155
    %v2159 = vadd.f32 %v2150, %v2155
    %v2160 = vadd.f32 %v2151, %v2155
    %v2161 = vmax.f32 %v2157, 0.0
    %v2162 = vmax.f32 %v2158, 0.0
    %v2163 = vmax.f32 %v2159, 0.0
    %v2164 = vmax.f32 %v2160, 0.0
    %2165 = vst [vmem:[#allocation2] sm:$0xff] %v2161
    %2166 = vst [vmem:[#allocation2 + $0x8] sm:$0xff] %v2162
    %2167 = vst [vmem:[#allocation2 + $0x10] sm:$0xff] %v2163
    %2168 = vst [vmem:[#allocation2 + $0x18] sm:$0xff] %v2164
    // Predicated region
    $region18: #{tpu_custom_call.1} parent=1 // pred_check
      _
    $region19: #{tpu_custom_call.1} parent=1 // pred_check_branch
      %2170 = sbr.rel (0) target = $region21
    $region20: #{tpu_custom_call.1} parent=1 // pred_region
      %2172 = vsyncadd [#allocation3], 0
      %s2174 = sshll.u32 [#allocation2], 4
      %s2175 = int_to_ptr.vmem [resolvable:$true] %s2174
      %s2176 = sshll.u32 %s4, 4
      %s2177 = int_to_ptr.hbm [resolvable:$true] %s2176
      %2179 = dma.vmem_to_hbm [thread:$0]  %s2175, 512, %s2177, [#allocation3]
    $region21: #{tpu_custom_call.1} parent=1 // pred_fallthru
      _
    // Predicated region
    $region22: #{tpu_custom_call.1} parent=1 // pred_check
      _
    $region23: #{tpu_custom_call.1} parent=1 // pred_check_branch
      %2181 = sbr.rel (0) target = $region25
    $region24: #{tpu_custom_call.1} parent=1 // pred_region
      %2183 = dma.done [#allocation3], 512
    $region25: #{tpu_custom_call.1} parent=1 // pred_fallthru
      _
    %2184 = vsyncpa [#allocation3], 1

</llo_original>
